<compile_context>
chip_gen: v5e
topology: v5e:2x2
jax: 0.10.0
libtpu: 0.0.40
codegen_flags: <defaults>
</compile_context>

<pallas_src>
import functools
import math

import jax
import jax.numpy as jnp
from jax import lax
from jax.experimental import pallas as pl
from jax.experimental.pallas import tpu as pltpu


# ---------------------------------------------------------------------------
# Kernel 1: fused head-major Q/K/V projection (single pass over x)
# ---------------------------------------------------------------------------
def qkv_proj_kernel(x_ref, wq_ref, wk_ref, wv_ref, bq_ref, bk_ref, bv_ref,
                    q_ref, k_ref, v_ref,
                    accq_sc, acck_sc, accv_sc, *, num_heads):
    kc = pl.program_id(2)

    @pl.when(kc == 0)
    def _():
        accq_sc[...] = jnp.zeros(accq_sc.shape, accq_sc.dtype)
        acck_sc[...] = jnp.zeros(acck_sc.shape, acck_sc.dtype)
        accv_sc[...] = jnp.zeros(accv_sc.shape, accv_sc.dtype)

    x = x_ref[0]                                           # (TM, TKc) compute dtype
    # Head-major weights -> per-head MXU matmuls; no lane slicing / stacking.
    for h in range(num_heads):
        accq_sc[h] += jnp.dot(x, wq_ref[h], preferred_element_type=jnp.float32)
        acck_sc[h] += jnp.dot(x, wk_ref[h], preferred_element_type=jnp.float32)
        accv_sc[h] += jnp.dot(x, wv_ref[h], preferred_element_type=jnp.float32)

    @pl.when(kc == pl.num_programs(2) - 1)
    def _():
        q_ref[0] = (accq_sc[...] + bq_ref[...]).astype(q_ref.dtype)
        k_ref[0] = (acck_sc[...] + bk_ref[...]).astype(k_ref.dtype)
        v_ref[0] = (accv_sc[...] + bv_ref[...]).astype(v_ref.dtype)


# ---------------------------------------------------------------------------
# Kernel 2: flash attention (online softmax) + output projection
# ---------------------------------------------------------------------------
def attn_kernel(q_ref, k_ref, v_ref, wp_ref, bp_ref, o_ref,
                m_sc, l_sc, acc_sc,
                *, num_heads, compute_dtype, exp_dtype, approx_recip):
    ki = pl.program_id(2)

    @pl.when(ki == 0)
    def _():
        m_sc[...] = jnp.full(m_sc.shape, -jnp.inf, m_sc.dtype)
        l_sc[...] = jnp.zeros(l_sc.shape, l_sc.dtype)
        acc_sc[...] = jnp.zeros(acc_sc.shape, acc_sc.dtype)

    q = q_ref[0]                                           # (H, TQ, D) — scale folded into W_q
    k = k_ref[0]                                           # (H, TK, D)
    v = v_ref[0]                                           # (H, TK, D)

    # energy[h, q, k] = sum_d q[h,q,d] * k[h,k,d]  (batched over H, no transposes)
    s = lax.dot_general(q, k, (((2,), (2,)), ((0,), (0,))),
                        preferred_element_type=jnp.float32)        # (H, TQ, TK) f32

    m_prev = m_sc[...]                                             # (H, TQ, 1)
    m_new = jnp.maximum(m_prev, jnp.max(s, axis=-1, keepdims=True))
    alpha = jnp.exp(m_prev - m_new)
    p = jnp.exp((s - m_new).astype(exp_dtype))                     # bf16 exp on v6e/v7x
    l_sc[...] = alpha * l_sc[...] + jnp.sum(p, axis=-1, keepdims=True,
                                            dtype=jnp.float32)
    ctx = lax.dot_general(p.astype(v.dtype), v, (((2,), (1,)), ((0,), (0,))),
                          preferred_element_type=jnp.float32)      # (H, TQ, D)
    acc_sc[...] = alpha * acc_sc[...] + ctx
    m_sc[...] = m_new

    @pl.when(ki == pl.num_programs(2) - 1)
    def _():
        inv_l = pl.reciprocal(l_sc[...], approx=approx_recip)      # (H, TQ, 1)
        out_h = (acc_sc[...] * inv_l).astype(compute_dtype)        # (H, TQ, D)
        tq = acc_sc.shape[1]
        e_out = wp_ref.shape[2]
        # joint (H, D) contraction with head-major W_p: no (TQ, E) repack scratch
        proj = jnp.zeros((tq, e_out), jnp.float32)
        for h in range(num_heads):
            proj = proj + jnp.dot(out_h[h], wp_ref[h],
                                  preferred_element_type=jnp.float32)
        o_ref[0] = (proj + bp_ref[...]).astype(o_ref.dtype)


# ---------------------------------------------------------------------------
# Helpers
# ---------------------------------------------------------------------------
def _pick_tile(n, target, candidates=(256, 128, 64, 32, 16, 8)):
    if n <= target:
        return n
    if n % target == 0:
        return target
    for t in candidates:
        if t <= target and n % t == 0:
            return t
    return n


def _tpu_defaults():
    """Best-effort chip query: (vmem_capacity_bytes, is_v5e). Safe fallbacks."""
    vmem_cap = 64 * 1024 * 1024          # conservative (v7x per-TC)
    is_v5e = False
    try:
        info = pltpu.get_tpu_info()
        vmem_cap = int(getattr(info, "vmem_capacity_bytes", vmem_cap))
        name = str(getattr(info, "chip_version", "") or info).lower()
        is_v5e = any(tag in name for tag in ("v5e", "v5 lite", "v5lite", "5_lite"))
    except Exception:
        pass
    return vmem_cap, is_v5e


def _const_spec(shape):
    """Constant-index BlockSpec; single-buffered when pipeline_mode is supported."""
    ndim = len(shape)
    index_map = lambda *_: (0,) * ndim
    try:
        return pl.BlockSpec(shape, index_map, pipeline_mode=pl.Buffered(1))
    except (TypeError, ValueError):
        return pl.BlockSpec(shape, index_map)


# ---------------------------------------------------------------------------
# Wrapper
# ---------------------------------------------------------------------------
def multi_head_attention(x, params, *, num_heads,
                         compute_dtype=jnp.bfloat16,
                         q_tile=None, kv_tile=None):
    """x: (B, N, E) float32. params: dict of f32 weights/biases (see _init_linear)."""
    B, N, E = x.shape
    H = num_heads
    assert E % H == 0, "emb_size must be divisible by num_heads"
    D = E // H

    cdt = jnp.dtype(compute_dtype)
    f32 = jnp.float32
    fast = cdt != jnp.dtype(jnp.float32)

    vmem_cap, is_v5e = _tpu_defaults()
    seq_target = 128 if is_v5e else 256                    # v5e MXU is 128-deep
    TQ = q_tile or _pick_tile(N, seq_target)
    TK = kv_tile or _pick_tile(N, seq_target)
    assert N % TQ == 0 and N % TK == 0, "sequence length must be divisible by tiles"
    TM = TQ                                                # projection row tile

    # contraction tiling for the projection: keep weights resident when they fit
    w_resident = 3 * E * E * cdt.itemsize
    if w_resident <= int(0.35 * vmem_cap):
        TKc = E
    else:
        TKc = _pick_tile(E, 512, candidates=(512, 256, 128))
    assert E % TKc == 0
    nkc = E // TKc

    exp_dtype = cdt if (fast and not is_v5e) else f32      # bf16 EUP only on v6e/v7x
    approx_recip = fast
    inv_scale = 1.0 / math.sqrt(E)                         # module divides by sqrt(emb_size)

    # ---- head-major weights; fold the attention scale into W_q / b_q once (f32 math)
    def head_major(w):                                     # (E, H*D) -> (H, E, D)
        return jnp.transpose(w.reshape(E, H, D), (1, 0, 2))

    wq = head_major(params["wq"] * inv_scale).astype(cdt)
    wk = head_major(params["wk"]).astype(cdt)
    wv = head_major(params["wv"]).astype(cdt)
    bq = (params["bq"].reshape(H, 1, D) * inv_scale).astype(f32)
    bk = params["bk"].reshape(H, 1, D).astype(f32)
    bv = params["bv"].reshape(H, 1, D).astype(f32)
    wp = params["wp"].reshape(H, D, E).astype(cdt)         # head-major output proj
    bp = params["bp"].astype(f32)                          # (1, E)

    x_in = x.astype(cdt)                                   # stream x at compute precision

    nm = N // TM
    nq, nk = N // TQ, N // TK

    # ---------------- kernel 1: QKV projection ----------------
    if nkc == 1:
        w_spec = _const_spec((H, E, D))
    else:
        w_spec = pl.BlockSpec((H, TKc, D), lambda b, mi, kc: (0, kc, 0))
    b_spec = _const_spec((H, 1, D))
    qkv_sds = jax.ShapeDtypeStruct((B, H, N, D), cdt)

    proj_est = (2 * TM * TKc * cdt.itemsize                    # x tiles (dbl-buffered)
                + 3 * 2 * H * TKc * D * cdt.itemsize           # weight tiles
                + 3 * H * 8 * max(D, 128) * 4                  # biases (padded)
                + 3 * 2 * H * TM * D * cdt.itemsize            # q/k/v out blocks
                + 3 * H * TM * D * 4)                          # f32 accumulators
    proj_vmem = int(min(max(proj_est * 3 // 2, 32 * 2**20),
                        int(0.8 * vmem_cap), 100 * 2**20))

    w_fetches = 1 if nkc == 1 else B * nm
    proj_cost = pl.CostEstimate(
        flops=int(2 * 3 * B * N * E * E),
        transcendentals=0,
        bytes_accessed=int(B * N * E * cdt.itemsize
                           + w_fetches * 3 * E * E * cdt.itemsize
                           + 3 * B * N * E * cdt.itemsize))

    q_hm, k_hm, v_hm = pl.pallas_call(
        functools.partial(qkv_proj_kernel, num_heads=H),
        out_shape=(qkv_sds, qkv_sds, qkv_sds),
        grid_spec=pltpu.PrefetchScalarGridSpec(
            num_scalar_prefetch=0,
            grid=(B, nm, nkc),
            in_specs=[
                pl.BlockSpec((1, TM, TKc), lambda b, mi, kc: (b, mi, kc)),
                w_spec, w_spec, w_spec,
                b_spec, b_spec, b_spec,
            ],
            out_specs=[
                pl.BlockSpec((1, H, TM, D), lambda b, mi, kc: (b, 0, mi, 0)),
                pl.BlockSpec((1, H, TM, D), lambda b, mi, kc: (b, 0, mi, 0)),
                pl.BlockSpec((1, H, TM, D), lambda b, mi, kc: (b, 0, mi, 0)),
            ],
            scratch_shapes=[pltpu.VMEM((H, TM, D), jnp.float32) for _ in range(3)],
        ),
        compiler_params=pltpu.CompilerParams(
            dimension_semantics=("parallel", "parallel", "arbitrary"),
            vmem_limit_bytes=proj_vmem),
        cost_estimate=proj_cost,
    )(x_in, wq, wk, wv, bq, bk, bv)

    # ---------------- kernel 2: flash attention + output projection ----------------
    q_spec = pl.BlockSpec((1, H, TQ, D), lambda b, qi, ki: (b, 0, qi, 0))
    kv_spec = pl.BlockSpec((1, H, TK, D), lambda b, qi, ki: (b, 0, ki, 0))
    wp_spec = _const_spec((H, D, E))
    bp_spec = _const_spec((1, E))
    o_spec = pl.BlockSpec((1, TQ, E), lambda b, qi, ki: (b, qi, 0))

    attn_est = (2 * H * TQ * D * cdt.itemsize                  # q block
                + 2 * 2 * H * TK * D * cdt.itemsize            # k, v blocks (dbl-buffered)
                + E * E * cdt.itemsize + E * 4                 # wp, bp (resident)
                + 2 * TQ * E * x.dtype.itemsize                # output block
                + 2 * H * TQ * 128 * 4                         # m, l (lane-padded)
                + H * TQ * D * 4                               # accumulator
                + 4 * H * TQ * TK * 4)                         # score/exp temporaries
    attn_vmem = int(min(max(attn_est * 3 // 2, 32 * 2**20),
                        int(0.8 * vmem_cap), 100 * 2**20))

    attn_cost = pl.CostEstimate(
        flops=int(4 * B * H * N * N * D + 2 * B * N * E * E),
        transcendentals=int(B * H * N * N),
        bytes_accessed=int(B * N * E * cdt.itemsize            # q
                           + 2 * B * nq * N * E * cdt.itemsize # k, v (re-read per q tile)
                           + B * N * E * x.dtype.itemsize      # out
                           + E * E * cdt.itemsize))            # wp

    out = pl.pallas_call(
        functools.partial(attn_kernel, num_heads=H, compute_dtype=cdt,
                          exp_dtype=exp_dtype, approx_recip=approx_recip),
        out_shape=jax.ShapeDtypeStruct((B, N, E), x.dtype),
        grid_spec=pltpu.PrefetchScalarGridSpec(
            num_scalar_prefetch=0,
            grid=(B, nq, nk),
            in_specs=[q_spec, kv_spec, kv_spec, wp_spec, bp_spec],
            out_specs=o_spec,
            scratch_shapes=[
                pltpu.VMEM((H, TQ, 1), jnp.float32),   # running max
                pltpu.VMEM((H, TQ, 1), jnp.float32),   # running sum
                pltpu.VMEM((H, TQ, D), jnp.float32),   # output accumulator
            ],
        ),
        compiler_params=pltpu.CompilerParams(
            dimension_semantics=("parallel", "parallel", "arbitrary"),
            vmem_limit_bytes=attn_vmem),
        cost_estimate=attn_cost,
    )(q_hm, k_hm, v_hm, wp, bp)
    return out


# ---------------------------------------------------------------------------
# Init + pure-JAX reference + test
# ---------------------------------------------------------------------------
def _init_linear(key, fan_in, fan_out):
    """Deterministic init mimicking nn.Linear (uniform +/- 1/sqrt(fan_in))."""
    kw, kb = jax.random.split(key)
    bound = 1.0 / math.sqrt(fan_in)
    w = jax.random.uniform(kw, (fan_in, fan_out), jnp.float32, -bound, bound)
    b = jax.random.uniform(kb, (1, fan_out), jnp.float32, -bound, bound)
    return w, b


def reference_mha(x, params, *, num_heads):
    """Pure-JAX reference matching the PyTorch forward (eval mode, mask=None)."""
    B, N, E = x.shape
    D = E // num_heads
    scaling = E ** 0.5

    def proj(w, b):
        y = x @ w + b[0]                                               # (B, N, E)
        return y.reshape(B, N, num_heads, D).transpose(0, 2, 1, 3)     # (B, H, N, D)

    q = proj(params["wq"], params["bq"])
    k = proj(params["wk"], params["bk"])
    v = proj(params["wv"], params["bv"])
    energy = jnp.einsum("bhqd,bhkd->bhqk", q, k)
    att = jax.nn.softmax(energy / scaling, axis=-1)
    out = jnp.einsum("bhal,bhlv->bhav", att, v)                        # (B, H, N, D)
    out = out.transpose(0, 2, 1, 3).reshape(B, N, E)
    return out @ params["wp"] + params["bp"][0]


if __name__ == "__main__":
    B, N, E, H = 2, 8, 32, 4
    dropout = 0.0  # eval-mode: identity

    key = jax.random.PRNGKey(0)
    kx, kq, kk, kv, kp = jax.random.split(key, 5)

    x = jax.random.normal(kx, (B, N, E), dtype=jnp.float32)

    wq, bq = _init_linear(kq, E, E)
    wk, bk = _init_linear(kk, E, E)
    wv, bv = _init_linear(kv, E, E)
    wp, bp = _init_linear(kp, E, E)
    params = dict(wq=wq, bq=bq, wk=wk, bk=bk, wv=wv, bv=bv, wp=wp, bp=bp)

    ref = jax.block_until_ready(reference_mha(x, params, num_heads=H))

    # Exact-math path (f32 MXU inputs, f32 exp, exact reciprocal): tight check of the
    # two-kernel / online-softmax restructuring.
    out_f32 = jax.block_until_ready(
        multi_head_attention(x, params, num_heads=H, compute_dtype=jnp.float32))
    assert out_f32.shape == (B, N, E)
    assert jnp.allclose(out_f32, ref, atol=1e-4, rtol=1e-4), "f32 path mismatch vs reference"

    # Default fast path (bf16 MXU inputs, f32 accumulation, bf16 exp where supported).
    out = jax.block_until_ready(multi_head_attention(x, params, num_heads=H))
    assert out.shape == (B, N, E)
    assert jnp.allclose(out, ref, atol=4e-2, rtol=4e-2), "bf16 path mismatch vs reference"

    print("KERNEL_OK")
</pallas_src>

<mosaic_0001>
module attributes {stable_mosaic.version = 11 : i64} {
  func.func @qkv_proj_kernel(%arg0: i32, %arg1: i32, %arg2: i32, %arg3: memref<1x8x32xf32, #tpu.memory_space<vmem>>, %arg4: memref<4x32x8xf32, #tpu.memory_space<vmem>>, %arg5: memref<4x32x8xf32, #tpu.memory_space<vmem>>, %arg6: memref<4x32x8xf32, #tpu.memory_space<vmem>>, %arg7: memref<4x1x8xf32, #tpu.memory_space<vmem>>, %arg8: memref<4x1x8xf32, #tpu.memory_space<vmem>>, %arg9: memref<4x1x8xf32, #tpu.memory_space<vmem>>, %arg10: memref<1x4x8x8xf32, #tpu.memory_space<vmem>>, %arg11: memref<1x4x8x8xf32, #tpu.memory_space<vmem>>, %arg12: memref<1x4x8x8xf32, #tpu.memory_space<vmem>>, %arg13: memref<4x8x8xf32, #tpu.memory_space<vmem>>, %arg14: memref<4x8x8xf32, #tpu.memory_space<vmem>>, %arg15: memref<4x8x8xf32, #tpu.memory_space<vmem>>) attributes {dimension_semantics = [#tpu.dimension_semantics<parallel>, #tpu.dimension_semantics<parallel>, #tpu.dimension_semantics<arbitrary>], iteration_bounds = array<i64: 2, 1, 1>, scalar_prefetch = 0 : i64, scratch_operands = 3 : i64, tpu.core_type = #tpu.core_type<tc>, window_params = [{transform_indices = @transform_0, window_bounds = array<i64: 1, 8, 32>}, {pipeline_mode = #tpu.pipeline_mode<synchronous>, transform_indices = @transform_1, window_bounds = array<i64: 4, 32, 8>}, {pipeline_mode = #tpu.pipeline_mode<synchronous>, transform_indices = @transform_2, window_bounds = array<i64: 4, 32, 8>}, {pipeline_mode = #tpu.pipeline_mode<synchronous>, transform_indices = @transform_3, window_bounds = array<i64: 4, 32, 8>}, {pipeline_mode = #tpu.pipeline_mode<synchronous>, transform_indices = @transform_4, window_bounds = array<i64: 4, 1, 8>}, {pipeline_mode = #tpu.pipeline_mode<synchronous>, transform_indices = @transform_5, window_bounds = array<i64: 4, 1, 8>}, {pipeline_mode = #tpu.pipeline_mode<synchronous>, transform_indices = @transform_6, window_bounds = array<i64: 4, 1, 8>}, {transform_indices = @transform_7, window_bounds = array<i64: 1, 4, 8, 8>}, {transform_indices = @transform_8, window_bounds = array<i64: 1, 4, 8, 8>}, {transform_indices = @transform_9, window_bounds = array<i64: 1, 4, 8, 8>}]} {
    %c0_i32 = arith.constant 0 : i32
    %0 = arith.cmpi eq, %arg2, %c0_i32 : i32
    %1 = arith.extui %0 : i1 to i32
    %c0_i32_0 = arith.constant 0 : i32
    %2 = arith.cmpi ne, %1, %c0_i32_0 : i32
    scf.if %2 {
      %cst_121 = arith.constant 0.000000e+00 : f32
      %116 = vector.broadcast %cst_121 : f32 to vector<4x8x8xf32>
      %c0_122 = arith.constant 0 : index
      %c0_123 = arith.constant 0 : index
      %c0_124 = arith.constant 0 : index
      %117 = vector.load %arg13[%c0_122, %c0_123, %c0_124] : memref<4x8x8xf32, #tpu.memory_space<vmem>>, vector<4x8x8xf32>
      tpu.vector_store %arg13[%c0_122, %c0_123, %c0_124], %116 {strides = array<i32>} : memref<4x8x8xf32, #tpu.memory_space<vmem>>, vector<4x8x8xf32>,
      %cst_125 = arith.constant 0.000000e+00 : f32
      %118 = vector.broadcast %cst_125 : f32 to vector<4x8x8xf32>
      %c0_126 = arith.constant 0 : index
      %c0_127 = arith.constant 0 : index
      %c0_128 = arith.constant 0 : index
      %119 = vector.load %arg14[%c0_126, %c0_127, %c0_128] : memref<4x8x8xf32, #tpu.memory_space<vmem>>, vector<4x8x8xf32>
      tpu.vector_store %arg14[%c0_126, %c0_127, %c0_128], %118 {strides = array<i32>} : memref<4x8x8xf32, #tpu.memory_space<vmem>>, vector<4x8x8xf32>,
      %cst_129 = arith.constant 0.000000e+00 : f32
      %120 = vector.broadcast %cst_129 : f32 to vector<4x8x8xf32>
      %c0_130 = arith.constant 0 : index
      %c0_131 = arith.constant 0 : index
      %c0_132 = arith.constant 0 : index
      %121 = vector.load %arg15[%c0_130, %c0_131, %c0_132] : memref<4x8x8xf32, #tpu.memory_space<vmem>>, vector<4x8x8xf32>
      tpu.vector_store %arg15[%c0_130, %c0_131, %c0_132], %120 {strides = array<i32>} : memref<4x8x8xf32, #tpu.memory_space<vmem>>, vector<4x8x8xf32>,
    } else {
    }
    %c0 = arith.constant 0 : index
    %c0_1 = arith.constant 0 : index
    %c0_2 = arith.constant 0 : index
    %3 = vector.load %arg3[%c0, %c0_1, %c0_2] : memref<1x8x32xf32, #tpu.memory_space<vmem>>, vector<1x8x32xf32>
    %4 = vector.shape_cast %3 : vector<1x8x32xf32> to vector<8x32xf32>
    %c0_3 = arith.constant 0 : index
    %c0_4 = arith.constant 0 : index
    %c0_5 = arith.constant 0 : index
    %5 = vector.load %arg13[%c0_3, %c0_4, %c0_5] : memref<4x8x8xf32, #tpu.memory_space<vmem>>, vector<1x8x8xf32>
    %6 = vector.shape_cast %5 : vector<1x8x8xf32> to vector<8x8xf32>
    %c0_6 = arith.constant 0 : index
    %c0_7 = arith.constant 0 : index
    %c0_8 = arith.constant 0 : index
    %7 = vector.load %arg4[%c0_6, %c0_7, %c0_8] : memref<4x32x8xf32, #tpu.memory_space<vmem>>, vector<1x32x8xf32>
    %8 = vector.shape_cast %7 : vector<1x32x8xf32> to vector<32x8xf32>
    %cst = arith.constant dense<0.000000e+00> : vector<8x8xf32>
    %9 = tpu.matmul %4, %8, %cst {dimension_numbers = #tpu.dot_dimension_numbers<[1], [0], [0], [1], [0, 0, 1, 1], [], []>} : vector<8x32xf32>, vector<32x8xf32>, vector<8x8xf32> -> vector<8x8xf32>
    %10 = arith.addf %6, %9 : vector<8x8xf32>
    %c0_9 = arith.constant 0 : index
    %c0_10 = arith.constant 0 : index
    %c0_11 = arith.constant 0 : index
    %11 = vector.load %arg13[%c0_9, %c0_10, %c0_11] : memref<4x8x8xf32, #tpu.memory_space<vmem>>, vector<1x8x8xf32>
    %12 = vector.shape_cast %11 : vector<1x8x8xf32> to vector<8x8xf32>
    %13 = vector.shape_cast %10 : vector<8x8xf32> to vector<1x8x8xf32>
    tpu.vector_store %arg13[%c0_9, %c0_10, %c0_11], %13 {strides = array<i32>} : memref<4x8x8xf32, #tpu.memory_space<vmem>>, vector<1x8x8xf32>,
    %c0_12 = arith.constant 0 : index
    %c0_13 = arith.constant 0 : index
    %c0_14 = arith.constant 0 : index
    %14 = vector.load %arg14[%c0_12, %c0_13, %c0_14] : memref<4x8x8xf32, #tpu.memory_space<vmem>>, vector<1x8x8xf32>
    %15 = vector.shape_cast %14 : vector<1x8x8xf32> to vector<8x8xf32>
    %c0_15 = arith.constant 0 : index
    %c0_16 = arith.constant 0 : index
    %c0_17 = arith.constant 0 : index
    %16 = vector.load %arg5[%c0_15, %c0_16, %c0_17] : memref<4x32x8xf32, #tpu.memory_space<vmem>>, vector<1x32x8xf32>
    %17 = vector.shape_cast %16 : vector<1x32x8xf32> to vector<32x8xf32>
    %cst_18 = arith.constant dense<0.000000e+00> : vector<8x8xf32>
    %18 = tpu.matmul %4, %17, %cst_18 {dimension_numbers = #tpu.dot_dimension_numbers<[1], [0], [0], [1], [0, 0, 1, 1], [], []>} : vector<8x32xf32>, vector<32x8xf32>, vector<8x8xf32> -> vector<8x8xf32>
    %19 = arith.addf %15, %18 : vector<8x8xf32>
    %c0_19 = arith.constant 0 : index
    %c0_20 = arith.constant 0 : index
    %c0_21 = arith.constant 0 : index
    %20 = vector.load %arg14[%c0_19, %c0_20, %c0_21] : memref<4x8x8xf32, #tpu.memory_space<vmem>>, vector<1x8x8xf32>
    %21 = vector.shape_cast %20 : vector<1x8x8xf32> to vector<8x8xf32>
    %22 = vector.shape_cast %19 : vector<8x8xf32> to vector<1x8x8xf32>
    tpu.vector_store %arg14[%c0_19, %c0_20, %c0_21], %22 {strides = array<i32>} : memref<4x8x8xf32, #tpu.memory_space<vmem>>, vector<1x8x8xf32>,
    %c0_22 = arith.constant 0 : index
    %c0_23 = arith.constant 0 : index
    %c0_24 = arith.constant 0 : index
    %23 = vector.load %arg15[%c0_22, %c0_23, %c0_24] : memref<4x8x8xf32, #tpu.memory_space<vmem>>, vector<1x8x8xf32>
    %24 = vector.shape_cast %23 : vector<1x8x8xf32> to vector<8x8xf32>
    %c0_25 = arith.constant 0 : index
    %c0_26 = arith.constant 0 : index
    %c0_27 = arith.constant 0 : index
    %25 = vector.load %arg6[%c0_25, %c0_26, %c0_27] : memref<4x32x8xf32, #tpu.memory_space<vmem>>, vector<1x32x8xf32>
    %26 = vector.shape_cast %25 : vector<1x32x8xf32> to vector<32x8xf32>
    %cst_28 = arith.constant dense<0.000000e+00> : vector<8x8xf32>
    %27 = tpu.matmul %4, %26, %cst_28 {dimension_numbers = #tpu.dot_dimension_numbers<[1], [0], [0], [1], [0, 0, 1, 1], [], []>} : vector<8x32xf32>, vector<32x8xf32>, vector<8x8xf32> -> vector<8x8xf32>
    %28 = arith.addf %24, %27 : vector<8x8xf32>
    %c0_29 = arith.constant 0 : index
    %c0_30 = arith.constant 0 : index
    %c0_31 = arith.constant 0 : index
    %29 = vector.load %arg15[%c0_29, %c0_30, %c0_31] : memref<4x8x8xf32, #tpu.memory_space<vmem>>, vector<1x8x8xf32>
    %30 = vector.shape_cast %29 : vector<1x8x8xf32> to vector<8x8xf32>
    %31 = vector.shape_cast %28 : vector<8x8xf32> to vector<1x8x8xf32>
    tpu.vector_store %arg15[%c0_29, %c0_30, %c0_31], %31 {strides = array<i32>} : memref<4x8x8xf32, #tpu.memory_space<vmem>>, vector<1x8x8xf32>,
    %c1 = arith.constant 1 : index
    %c0_32 = arith.constant 0 : index
    %c0_33 = arith.constant 0 : index
    %32 = vector.load %arg13[%c1, %c0_32, %c0_33] : memref<4x8x8xf32, #tpu.memory_space<vmem>>, vector<1x8x8xf32>
    %33 = vector.shape_cast %32 : vector<1x8x8xf32> to vector<8x8xf32>
    %c1_34 = arith.constant 1 : index
    %c0_35 = arith.constant 0 : index
    %c0_36 = arith.constant 0 : index
    %34 = vector.load %arg4[%c1_34, %c0_35, %c0_36] : memref<4x32x8xf32, #tpu.memory_space<vmem>>, vector<1x32x8xf32>
    %35 = vector.shape_cast %34 : vector<1x32x8xf32> to vector<32x8xf32>
    %cst_37 = arith.constant dense<0.000000e+00> : vector<8x8xf32>
    %36 = tpu.matmul %4, %35, %cst_37 {dimension_numbers = #tpu.dot_dimension_numbers<[1], [0], [0], [1], [0, 0, 1, 1], [], []>} : vector<8x32xf32>, vector<32x8xf32>, vector<8x8xf32> -> vector<8x8xf32>
    %37 = arith.addf %33, %36 : vector<8x8xf32>
    %c1_38 = arith.constant 1 : index
    %c0_39 = arith.constant 0 : index
    %c0_40 = arith.constant 0 : index
    %38 = vector.load %arg13[%c1_38, %c0_39, %c0_40] : memref<4x8x8xf32, #tpu.memory_space<vmem>>, vector<1x8x8xf32>
    %39 = vector.shape_cast %38 : vector<1x8x8xf32> to vector<8x8xf32>
    %40 = vector.shape_cast %37 : vector<8x8xf32> to vector<1x8x8xf32>
    tpu.vector_store %arg13[%c1_38, %c0_39, %c0_40], %40 {strides = array<i32>} : memref<4x8x8xf32, #tpu.memory_space<vmem>>, vector<1x8x8xf32>,
    %c1_41 = arith.constant 1 : index
    %c0_42 = arith.constant 0 : index
    %c0_43 = arith.constant 0 : index
    %41 = vector.load %arg14[%c1_41, %c0_42, %c0_43] : memref<4x8x8xf32, #tpu.memory_space<vmem>>, vector<1x8x8xf32>
    %42 = vector.shape_cast %41 : vector<1x8x8xf32> to vector<8x8xf32>
    %c1_44 = arith.constant 1 : index
    %c0_45 = arith.constant 0 : index
    %c0_46 = arith.constant 0 : index
    %43 = vector.load %arg5[%c1_44, %c0_45, %c0_46] : memref<4x32x8xf32, #tpu.memory_space<vmem>>, vector<1x32x8xf32>
    %44 = vector.shape_cast %43 : vector<1x32x8xf32> to vector<32x8xf32>
    %cst_47 = arith.constant dense<0.000000e+00> : vector<8x8xf32>
    %45 = tpu.matmul %4, %44, %cst_47 {dimension_numbers = #tpu.dot_dimension_numbers<[1], [0], [0], [1], [0, 0, 1, 1], [], []>} : vector<8x32xf32>, vector<32x8xf32>, vector<8x8xf32> -> vector<8x8xf32>
    %46 = arith.addf %42, %45 : vector<8x8xf32>
    %c1_48 = arith.constant 1 : index
    %c0_49 = arith.constant 0 : index
    %c0_50 = arith.constant 0 : index
    %47 = vector.load %arg14[%c1_48, %c0_49, %c0_50] : memref<4x8x8xf32, #tpu.memory_space<vmem>>, vector<1x8x8xf32>
    %48 = vector.shape_cast %47 : vector<1x8x8xf32> to vector<8x8xf32>
    %49 = vector.shape_cast %46 : vector<8x8xf32> to vector<1x8x8xf32>
    tpu.vector_store %arg14[%c1_48, %c0_49, %c0_50], %49 {strides = array<i32>} : memref<4x8x8xf32, #tpu.memory_space<vmem>>, vector<1x8x8xf32>,
    %c1_51 = arith.constant 1 : index
    %c0_52 = arith.constant 0 : index
    %c0_53 = arith.constant 0 : index
    %50 = vector.load %arg15[%c1_51, %c0_52, %c0_53] : memref<4x8x8xf32, #tpu.memory_space<vmem>>, vector<1x8x8xf32>
    %51 = vector.shape_cast %50 : vector<1x8x8xf32> to vector<8x8xf32>
    %c1_54 = arith.constant 1 : index
    %c0_55 = arith.constant 0 : index
    %c0_56 = arith.constant 0 : index
    %52 = vector.load %arg6[%c1_54, %c0_55, %c0_56] : memref<4x32x8xf32, #tpu.memory_space<vmem>>, vector<1x32x8xf32>
    %53 = vector.shape_cast %52 : vector<1x32x8xf32> to vector<32x8xf32>
    %cst_57 = arith.constant dense<0.000000e+00> : vector<8x8xf32>
    %54 = tpu.matmul %4, %53, %cst_57 {dimension_numbers = #tpu.dot_dimension_numbers<[1], [0], [0], [1], [0, 0, 1, 1], [], []>} : vector<8x32xf32>, vector<32x8xf32>, vector<8x8xf32> -> vector<8x8xf32>
    %55 = arith.addf %51, %54 : vector<8x8xf32>
    %c1_58 = arith.constant 1 : index
    %c0_59 = arith.constant 0 : index
    %c0_60 = arith.constant 0 : index
    %56 = vector.load %arg15[%c1_58, %c0_59, %c0_60] : memref<4x8x8xf32, #tpu.memory_space<vmem>>, vector<1x8x8xf32>
    %57 = vector.shape_cast %56 : vector<1x8x8xf32> to vector<8x8xf32>
    %58 = vector.shape_cast %55 : vector<8x8xf32> to vector<1x8x8xf32>
    tpu.vector_store %arg15[%c1_58, %c0_59, %c0_60], %58 {strides = array<i32>} : memref<4x8x8xf32, #tpu.memory_space<vmem>>, vector<1x8x8xf32>,
    %c2 = arith.constant 2 : index
    %c0_61 = arith.constant 0 : index
    %c0_62 = arith.constant 0 : index
    %59 = vector.load %arg13[%c2, %c0_61, %c0_62] : memref<4x8x8xf32, #tpu.memory_space<vmem>>, vector<1x8x8xf32>
    %60 = vector.shape_cast %59 : vector<1x8x8xf32> to vector<8x8xf32>
    %c2_63 = arith.constant 2 : index
    %c0_64 = arith.constant 0 : index
    %c0_65 = arith.constant 0 : index
    %61 = vector.load %arg4[%c2_63, %c0_64, %c0_65] : memref<4x32x8xf32, #tpu.memory_space<vmem>>, vector<1x32x8xf32>
    %62 = vector.shape_cast %61 : vector<1x32x8xf32> to vector<32x8xf32>
    %cst_66 = arith.constant dense<0.000000e+00> : vector<8x8xf32>
    %63 = tpu.matmul %4, %62, %cst_66 {dimension_numbers = #tpu.dot_dimension_numbers<[1], [0], [0], [1], [0, 0, 1, 1], [], []>} : vector<8x32xf32>, vector<32x8xf32>, vector<8x8xf32> -> vector<8x8xf32>
    %64 = arith.addf %60, %63 : vector<8x8xf32>
    %c2_67 = arith.constant 2 : index
    %c0_68 = arith.constant 0 : index
    %c0_69 = arith.constant 0 : index
    %65 = vector.load %arg13[%c2_67, %c0_68, %c0_69] : memref<4x8x8xf32, #tpu.memory_space<vmem>>, vector<1x8x8xf32>
    %66 = vector.shape_cast %65 : vector<1x8x8xf32> to vector<8x8xf32>
    %67 = vector.shape_cast %64 : vector<8x8xf32> to vector<1x8x8xf32>
    tpu.vector_store %arg13[%c2_67, %c0_68, %c0_69], %67 {strides = array<i32>} : memref<4x8x8xf32, #tpu.memory_space<vmem>>, vector<1x8x8xf32>,
    %c2_70 = arith.constant 2 : index
    %c0_71 = arith.constant 0 : index
    %c0_72 = arith.constant 0 : index
    %68 = vector.load %arg14[%c2_70, %c0_71, %c0_72] : memref<4x8x8xf32, #tpu.memory_space<vmem>>, vector<1x8x8xf32>
    %69 = vector.shape_cast %68 : vector<1x8x8xf32> to vector<8x8xf32>
    %c2_73 = arith.constant 2 : index
    %c0_74 = arith.constant 0 : index
    %c0_75 = arith.constant 0 : index
    %70 = vector.load %arg5[%c2_73, %c0_74, %c0_75] : memref<4x32x8xf32, #tpu.memory_space<vmem>>, vector<1x32x8xf32>
    %71 = vector.shape_cast %70 : vector<1x32x8xf32> to vector<32x8xf32>
    %cst_76 = arith.constant dense<0.000000e+00> : vector<8x8xf32>
    %72 = tpu.matmul %4, %71, %cst_76 {dimension_numbers = #tpu.dot_dimension_numbers<[1], [0], [0], [1], [0, 0, 1, 1], [], []>} : vector<8x32xf32>, vector<32x8xf32>, vector<8x8xf32> -> vector<8x8xf32>
    %73 = arith.addf %69, %72 : vector<8x8xf32>
    %c2_77 = arith.constant 2 : index
    %c0_78 = arith.constant 0 : index
    %c0_79 = arith.constant 0 : index
    %74 = vector.load %arg14[%c2_77, %c0_78, %c0_79] : memref<4x8x8xf32, #tpu.memory_space<vmem>>, vector<1x8x8xf32>
    %75 = vector.shape_cast %74 : vector<1x8x8xf32> to vector<8x8xf32>
    %76 = vector.shape_cast %73 : vector<8x8xf32> to vector<1x8x8xf32>
    tpu.vector_store %arg14[%c2_77, %c0_78, %c0_79], %76 {strides = array<i32>} : memref<4x8x8xf32, #tpu.memory_space<vmem>>, vector<1x8x8xf32>,
    %c2_80 = arith.constant 2 : index
    %c0_81 = arith.constant 0 : index
    %c0_82 = arith.constant 0 : index
    %77 = vector.load %arg15[%c2_80, %c0_81, %c0_82] : memref<4x8x8xf32, #tpu.memory_space<vmem>>, vector<1x8x8xf32>
    %78 = vector.shape_cast %77 : vector<1x8x8xf32> to vector<8x8xf32>
    %c2_83 = arith.constant 2 : index
    %c0_84 = arith.constant 0 : index
    %c0_85 = arith.constant 0 : index
    %79 = vector.load %arg6[%c2_83, %c0_84, %c0_85] : memref<4x32x8xf32, #tpu.memory_space<vmem>>, vector<1x32x8xf32>
    %80 = vector.shape_cast %79 : vector<1x32x8xf32> to vector<32x8xf32>
    %cst_86 = arith.constant dense<0.000000e+00> : vector<8x8xf32>
    %81 = tpu.matmul %4, %80, %cst_86 {dimension_numbers = #tpu.dot_dimension_numbers<[1], [0], [0], [1], [0, 0, 1, 1], [], []>} : vector<8x32xf32>, vector<32x8xf32>, vector<8x8xf32> -> vector<8x8xf32>
    %82 = arith.addf %78, %81 : vector<8x8xf32>
    %c2_87 = arith.constant 2 : index
    %c0_88 = arith.constant 0 : index
    %c0_89 = arith.constant 0 : index
    %83 = vector.load %arg15[%c2_87, %c0_88, %c0_89] : memref<4x8x8xf32, #tpu.memory_space<vmem>>, vector<1x8x8xf32>
    %84 = vector.shape_cast %83 : vector<1x8x8xf32> to vector<8x8xf32>
    %85 = vector.shape_cast %82 : vector<8x8xf32> to vector<1x8x8xf32>
    tpu.vector_store %arg15[%c2_87, %c0_88, %c0_89], %85 {strides = array<i32>} : memref<4x8x8xf32, #tpu.memory_space<vmem>>, vector<1x8x8xf32>,
    %c3 = arith.constant 3 : index
    %c0_90 = arith.constant 0 : index
    %c0_91 = arith.constant 0 : index
    %86 = vector.load %arg13[%c3, %c0_90, %c0_91] : memref<4x8x8xf32, #tpu.memory_space<vmem>>, vector<1x8x8xf32>
    %87 = vector.shape_cast %86 : vector<1x8x8xf32> to vector<8x8xf32>
    %c3_92 = arith.constant 3 : index
    %c0_93 = arith.constant 0 : index
    %c0_94 = arith.constant 0 : index
    %88 = vector.load %arg4[%c3_92, %c0_93, %c0_94] : memref<4x32x8xf32, #tpu.memory_space<vmem>>, vector<1x32x8xf32>
    %89 = vector.shape_cast %88 : vector<1x32x8xf32> to vector<32x8xf32>
    %cst_95 = arith.constant dense<0.000000e+00> : vector<8x8xf32>
    %90 = tpu.matmul %4, %89, %cst_95 {dimension_numbers = #tpu.dot_dimension_numbers<[1], [0], [0], [1], [0, 0, 1, 1], [], []>} : vector<8x32xf32>, vector<32x8xf32>, vector<8x8xf32> -> vector<8x8xf32>
    %91 = arith.addf %87, %90 : vector<8x8xf32>
    %c3_96 = arith.constant 3 : index
    %c0_97 = arith.constant 0 : index
    %c0_98 = arith.constant 0 : index
    %92 = vector.load %arg13[%c3_96, %c0_97, %c0_98] : memref<4x8x8xf32, #tpu.memory_space<vmem>>, vector<1x8x8xf32>
    %93 = vector.shape_cast %92 : vector<1x8x8xf32> to vector<8x8xf32>
    %94 = vector.shape_cast %91 : vector<8x8xf32> to vector<1x8x8xf32>
    tpu.vector_store %arg13[%c3_96, %c0_97, %c0_98], %94 {strides = array<i32>} : memref<4x8x8xf32, #tpu.memory_space<vmem>>, vector<1x8x8xf32>,
    %c3_99 = arith.constant 3 : index
    %c0_100 = arith.constant 0 : index
    %c0_101 = arith.constant 0 : index
    %95 = vector.load %arg14[%c3_99, %c0_100, %c0_101] : memref<4x8x8xf32, #tpu.memory_space<vmem>>, vector<1x8x8xf32>
    %96 = vector.shape_cast %95 : vector<1x8x8xf32> to vector<8x8xf32>
    %c3_102 = arith.constant 3 : index
    %c0_103 = arith.constant 0 : index
    %c0_104 = arith.constant 0 : index
    %97 = vector.load %arg5[%c3_102, %c0_103, %c0_104] : memref<4x32x8xf32, #tpu.memory_space<vmem>>, vector<1x32x8xf32>
    %98 = vector.shape_cast %97 : vector<1x32x8xf32> to vector<32x8xf32>
    %cst_105 = arith.constant dense<0.000000e+00> : vector<8x8xf32>
    %99 = tpu.matmul %4, %98, %cst_105 {dimension_numbers = #tpu.dot_dimension_numbers<[1], [0], [0], [1], [0, 0, 1, 1], [], []>} : vector<8x32xf32>, vector<32x8xf32>, vector<8x8xf32> -> vector<8x8xf32>
    %100 = arith.addf %96, %99 : vector<8x8xf32>
    %c3_106 = arith.constant 3 : index
    %c0_107 = arith.constant 0 : index
    %c0_108 = arith.constant 0 : index
    %101 = vector.load %arg14[%c3_106, %c0_107, %c0_108] : memref<4x8x8xf32, #tpu.memory_space<vmem>>, vector<1x8x8xf32>
    %102 = vector.shape_cast %101 : vector<1x8x8xf32> to vector<8x8xf32>
    %103 = vector.shape_cast %100 : vector<8x8xf32> to vector<1x8x8xf32>
    tpu.vector_store %arg14[%c3_106, %c0_107, %c0_108], %103 {strides = array<i32>} : memref<4x8x8xf32, #tpu.memory_space<vmem>>, vector<1x8x8xf32>,
    %c3_109 = arith.constant 3 : index
    %c0_110 = arith.constant 0 : index
    %c0_111 = arith.constant 0 : index
    %104 = vector.load %arg15[%c3_109, %c0_110, %c0_111] : memref<4x8x8xf32, #tpu.memory_space<vmem>>, vector<1x8x8xf32>
    %105 = vector.shape_cast %104 : vector<1x8x8xf32> to vector<8x8xf32>
    %c3_112 = arith.constant 3 : index
    %c0_113 = arith.constant 0 : index
    %c0_114 = arith.constant 0 : index
    %106 = vector.load %arg6[%c3_112, %c0_113, %c0_114] : memref<4x32x8xf32, #tpu.memory_space<vmem>>, vector<1x32x8xf32>
    %107 = vector.shape_cast %106 : vector<1x32x8xf32> to vector<32x8xf32>
    %cst_115 = arith.constant dense<0.000000e+00> : vector<8x8xf32>
    %108 = tpu.matmul %4, %107, %cst_115 {dimension_numbers = #tpu.dot_dimension_numbers<[1], [0], [0], [1], [0, 0, 1, 1], [], []>} : vector<8x32xf32>, vector<32x8xf32>, vector<8x8xf32> -> vector<8x8xf32>
    %109 = arith.addf %105, %108 : vector<8x8xf32>
    %c3_116 = arith.constant 3 : index
    %c0_117 = arith.constant 0 : index
    %c0_118 = arith.constant 0 : index
    %110 = vector.load %arg15[%c3_116, %c0_117, %c0_118] : memref<4x8x8xf32, #tpu.memory_space<vmem>>, vector<1x8x8xf32>
    %111 = vector.shape_cast %110 : vector<1x8x8xf32> to vector<8x8xf32>
    %112 = vector.shape_cast %109 : vector<8x8xf32> to vector<1x8x8xf32>
    tpu.vector_store %arg15[%c3_116, %c0_117, %c0_118], %112 {strides = array<i32>} : memref<4x8x8xf32, #tpu.memory_space<vmem>>, vector<1x8x8xf32>,
    %c0_i32_119 = arith.constant 0 : i32
    %113 = arith.cmpi eq, %arg2, %c0_i32_119 : i32
    %114 = arith.extui %113 : i1 to i32
    %c0_i32_120 = arith.constant 0 : i32
    %115 = arith.cmpi ne, %114, %c0_i32_120 : i32
    scf.if %115 {
      %c0_121 = arith.constant 0 : index
      %c0_122 = arith.constant 0 : index
      %c0_123 = arith.constant 0 : index
      %116 = vector.load %arg13[%c0_121, %c0_122, %c0_123] : memref<4x8x8xf32, #tpu.memory_space<vmem>>, vector<4x8x8xf32>
      %c0_124 = arith.constant 0 : index
      %c0_125 = arith.constant 0 : index
      %c0_126 = arith.constant 0 : index
      %117 = vector.load %arg7[%c0_124, %c0_125, %c0_126] : memref<4x1x8xf32, #tpu.memory_space<vmem>>, vector<4x1x8xf32>
      %118 = vector.broadcast %117 : vector<4x1x8xf32> to vector<4x8x8xf32>
      %119 = arith.addf %116, %118 : vector<4x8x8xf32>
      %c0_127 = arith.constant 0 : index
      %c0_128 = arith.constant 0 : index
      %c0_129 = arith.constant 0 : index
      %c0_130 = arith.constant 0 : index
      %120 = vector.load %arg10[%c0_127, %c0_128, %c0_129, %c0_130] : memref<1x4x8x8xf32, #tpu.memory_space<vmem>>, vector<1x4x8x8xf32>
      %121 = vector.shape_cast %120 : vector<1x4x8x8xf32> to vector<4x8x8xf32>
      %122 = vector.shape_cast %119 : vector<4x8x8xf32> to vector<1x4x8x8xf32>
      tpu.vector_store %arg10[%c0_127, %c0_128, %c0_129, %c0_130], %122 {strides = array<i32>} : memref<1x4x8x8xf32, #tpu.memory_space<vmem>>, vector<1x4x8x8xf32>,
      %c0_131 = arith.constant 0 : index
      %c0_132 = arith.constant 0 : index
      %c0_133 = arith.constant 0 : index
      %123 = vector.load %arg14[%c0_131, %c0_132, %c0_133] : memref<4x8x8xf32, #tpu.memory_space<vmem>>, vector<4x8x8xf32>
      %c0_134 = arith.constant 0 : index
      %c0_135 = arith.constant 0 : index
      %c0_136 = arith.constant 0 : index
      %124 = vector.load %arg8[%c0_134, %c0_135, %c0_136] : memref<4x1x8xf32, #tpu.memory_space<vmem>>, vector<4x1x8xf32>
      %125 = vector.broadcast %124 : vector<4x1x8xf32> to vector<4x8x8xf32>
      %126 = arith.addf %123, %125 : vector<4x8x8xf32>
      %c0_137 = arith.constant 0 : index
      %c0_138 = arith.constant 0 : index
      %c0_139 = arith.constant 0 : index
      %c0_140 = arith.constant 0 : index
      %127 = vector.load %arg11[%c0_137, %c0_138, %c0_139, %c0_140] : memref<1x4x8x8xf32, #tpu.memory_space<vmem>>, vector<1x4x8x8xf32>
      %128 = vector.shape_cast %127 : vector<1x4x8x8xf32> to vector<4x8x8xf32>
      %129 = vector.shape_cast %126 : vector<4x8x8xf32> to vector<1x4x8x8xf32>
      tpu.vector_store %arg11[%c0_137, %c0_138, %c0_139, %c0_140], %129 {strides = array<i32>} : memref<1x4x8x8xf32, #tpu.memory_space<vmem>>, vector<1x4x8x8xf32>,
      %c0_141 = arith.constant 0 : index
      %c0_142 = arith.constant 0 : index
      %c0_143 = arith.constant 0 : index
      %130 = vector.load %arg15[%c0_141, %c0_142, %c0_143] : memref<4x8x8xf32, #tpu.memory_space<vmem>>, vector<4x8x8xf32>
      %c0_144 = arith.constant 0 : index
      %c0_145 = arith.constant 0 : index
      %c0_146 = arith.constant 0 : index
      %131 = vector.load %arg9[%c0_144, %c0_145, %c0_146] : memref<4x1x8xf32, #tpu.memory_space<vmem>>, vector<4x1x8xf32>
      %132 = vector.broadcast %131 : vector<4x1x8xf32> to vector<4x8x8xf32>
      %133 = arith.addf %130, %132 : vector<4x8x8xf32>
      %c0_147 = arith.constant 0 : index
      %c0_148 = arith.constant 0 : index
      %c0_149 = arith.constant 0 : index
      %c0_150 = arith.constant 0 : index
      %134 = vector.load %arg12[%c0_147, %c0_148, %c0_149, %c0_150] : memref<1x4x8x8xf32, #tpu.memory_space<vmem>>, vector<1x4x8x8xf32>
      %135 = vector.shape_cast %134 : vector<1x4x8x8xf32> to vector<4x8x8xf32>
      %136 = vector.shape_cast %133 : vector<4x8x8xf32> to vector<1x4x8x8xf32>
      tpu.vector_store %arg12[%c0_147, %c0_148, %c0_149, %c0_150], %136 {strides = array<i32>} : memref<1x4x8x8xf32, #tpu.memory_space<vmem>>, vector<1x4x8x8xf32>,
    } else {
    }
    return
  }
  func.func @transform_0(%arg0: i32, %arg1: i32, %arg2: i32) -> (i32, i32, i32) {
    %c0_i32 = arith.constant 0 : i32
    return %arg0, %arg1, %arg2 : i32, i32, i32
  }
  func.func @transform_1(%arg0: i32, %arg1: i32, %arg2: i32) -> (i32, i32, i32) {
    %c0_i32 = arith.constant 0 : i32
    %c0_i32_0 = arith.constant 0 : i32
    %c0_i32_1 = arith.constant 0 : i32
    %c0_i32_2 = arith.constant 0 : i32
    return %c0_i32, %c0_i32_0, %c0_i32_1 : i32, i32, i32
  }
  func.func @transform_2(%arg0: i32, %arg1: i32, %arg2: i32) -> (i32, i32, i32) {
    %c0_i32 = arith.constant 0 : i32
    %c0_i32_0 = arith.constant 0 : i32
    %c0_i32_1 = arith.constant 0 : i32
    %c0_i32_2 = arith.constant 0 : i32
    return %c0_i32, %c0_i32_0, %c0_i32_1 : i32, i32, i32
  }
  func.func @transform_3(%arg0: i32, %arg1: i32, %arg2: i32) -> (i32, i32, i32) {
    %c0_i32 = arith.constant 0 : i32
    %c0_i32_0 = arith.constant 0 : i32
    %c0_i32_1 = arith.constant 0 : i32
    %c0_i32_2 = arith.constant 0 : i32
    return %c0_i32, %c0_i32_0, %c0_i32_1 : i32, i32, i32
  }
  func.func @transform_4(%arg0: i32, %arg1: i32, %arg2: i32) -> (i32, i32, i32) {
    %c0_i32 = arith.constant 0 : i32
    %c0_i32_0 = arith.constant 0 : i32
    %c0_i32_1 = arith.constant 0 : i32
    %c0_i32_2 = arith.constant 0 : i32
    return %c0_i32, %c0_i32_0, %c0_i32_1 : i32, i32, i32
  }
  func.func @transform_5(%arg0: i32, %arg1: i32, %arg2: i32) -> (i32, i32, i32) {
    %c0_i32 = arith.constant 0 : i32
    %c0_i32_0 = arith.constant 0 : i32
    %c0_i32_1 = arith.constant 0 : i32
    %c0_i32_2 = arith.constant 0 : i32
    return %c0_i32, %c0_i32_0, %c0_i32_1 : i32, i32, i32
  }
  func.func @transform_6(%arg0: i32, %arg1: i32, %arg2: i32) -> (i32, i32, i32) {
    %c0_i32 = arith.constant 0 : i32
    %c0_i32_0 = arith.constant 0 : i32
    %c0_i32_1 = arith.constant 0 : i32
    %c0_i32_2 = arith.constant 0 : i32
    return %c0_i32, %c0_i32_0, %c0_i32_1 : i32, i32, i32
  }
  func.func @transform_7(%arg0: i32, %arg1: i32, %arg2: i32) -> (i32, i32, i32, i32) {
    %c0_i32 = arith.constant 0 : i32
    %c0_i32_0 = arith.constant 0 : i32
    %c0_i32_1 = arith.constant 0 : i32
    return %arg0, %c0_i32, %arg1, %c0_i32_0 : i32, i32, i32, i32
  }
  func.func @transform_8(%arg0: i32, %arg1: i32, %arg2: i32) -> (i32, i32, i32, i32) {
    %c0_i32 = arith.constant 0 : i32
    %c0_i32_0 = arith.constant 0 : i32
    %c0_i32_1 = arith.constant 0 : i32
    return %arg0, %c0_i32, %arg1, %c0_i32_0 : i32, i32, i32, i32
  }
  func.func @transform_9(%arg0: i32, %arg1: i32, %arg2: i32) -> (i32, i32, i32, i32) {
    %c0_i32 = arith.constant 0 : i32
    %c0_i32_0 = arith.constant 0 : i32
    %c0_i32_1 = arith.constant 0 : i32
    return %arg0, %c0_i32, %arg1, %c0_i32_0 : i32, i32, i32, i32
  }
}

</mosaic_0001>

<llo_original>
// kernel: tpu_custom_call.1
$region0: #{tpu_custom_call.1}
  #allocation0 [shape = 'u32[]', space=smem, size = 0x4, offset = 0x4, fixed_abs, tag = 'smem constant byte address 0x4 - core index']
  #allocation1 [shape = 'u32[72,128]{1,0:T(1,128)}', space=vmem, size = 0x9000, scoped, tag = 'internal scratch']
  #allocation2 [shape = 'f32[4,8,8]{2,1,0:T(8,128)}', space=vmem, size = 0x4000, scoped, tag = 'scratch operand']
  #allocation3 [shape = 'f32[4,8,8]{2,1,0:T(8,128)}', space=vmem, size = 0x4000, scoped, tag = 'scratch operand']
  #allocation4 [shape = 'f32[4,8,8]{2,1,0:T(8,128)}', space=vmem, size = 0x4000, scoped, tag = 'scratch operand']
  %s0 = inlined_call_operand.vmem [shape: f32[2,8,32], index: 0, kind: input, shape index: {}]
  %s1 = inlined_call_operand.vmem [shape: f32[4,32,8], index: 1, kind: input, shape index: {}]
  %s2 = inlined_call_operand.vmem [shape: f32[4,32,8], index: 2, kind: input, shape index: {}]
  %s3 = inlined_call_operand.vmem [shape: f32[4,32,8], index: 3, kind: input, shape index: {}]
  %s4 = inlined_call_operand.vmem [shape: f32[4,1,8], index: 4, kind: input, shape index: {}]
  %s5 = inlined_call_operand.vmem [shape: f32[4,1,8], index: 5, kind: input, shape index: {}]
  %s6 = inlined_call_operand.vmem [shape: f32[4,1,8], index: 6, kind: input, shape index: {}]
  %s7 = inlined_call_operand.hbm [shape: f32[2,4,8,8], index: 7, kind: output, shape index: {0}]
  %s8 = inlined_call_operand.hbm [shape: f32[2,4,8,8], index: 8, kind: output, shape index: {1}]
  %s9 = inlined_call_operand.hbm [shape: f32[2,4,8,8], index: 9, kind: output, shape index: {2}]
  %10 = xla_tuple %s7, %s8, %s9
  %s11 = sld [smem:[#allocation0]]
  $region85: #{tpu_custom_call.1} parent=0
    _
  %s13 = ssub.s32 1, %s11
  %s14 = scalar_select 0, %s13, %s11
  $region1: #{tpu_custom_call.1} parent=0
    #allocation5 [shape = 'u8[32768]{0}', space=vmem, size = 0x8000, scoped, tag = 'output window, operand 0']
    #allocation6 [shape = 's32[2]{0}', space=sflag, size = 0x8, scoped, tag = 'scoped memory for tpu_custom_call.1']
    #allocation7 [shape = 'u8[32768]{0}', space=vmem, size = 0x8000, scoped, tag = 'output window, operand 1']
    #allocation8 [shape = 's32[2]{0}', space=sflag, size = 0x8, scoped, tag = 'scoped memory for tpu_custom_call.1']
    #allocation9 [shape = 'u8[32768]{0}', space=vmem, size = 0x8000, scoped, tag = 'output window, operand 2']
    %15 = vsyncpa [#allocation6], 0
    %s16 = scalar_lea.sflag [#allocation6], 1
    %17 = vsyncpa %s16, 0
    %18 = vsyncpa [#allocation8], 0
    %s19 = scalar_lea.sflag [#allocation8], 1
    %20 = vsyncpa %s19, 0
    loop: start=0, step=1, limit=4
    $region2: #{tpu_custom_call.1} parent=1 // loop_pre_header
      _
    $region3: #{tpu_custom_call.1} parent=1 // loop_header
      %s22 = sphi 0, %s26
      %p23 = scmp.ge.s32.totalorder %s22, 4
      %s29 = sphi 0, %s48
      %s30 = sphi 0, %s44
      %s31 = sphi 0, %s40
      %s32 = sphi 0, %s29
      %s33 = sphi 0, %s30
      %s34 = sphi 0, %s31
      %s35 = sphi 0, %s32
      %s36 = sphi 0, %s33
      %s37 = sphi 0, %s34
      %s55 = sphi 0, %s57
      %s58 = sphi 0, %s55
      %s59 = sphi 0, %s58
      %s75 = sphi 0, %s59
      %s79 = sphi 0, %s79
      %s81 = sphi 0, %s79
      %s82 = sphi 0, %s81
      %s96 = sphi 0, %s82
      %s100 = sphi 0, %s100
      %s102 = sphi 0, %s100
      %s103 = sphi 0, %s102
      %s117 = sphi 0, %s103
      %s121 = sphi 0, %s121
      %s123 = sphi 0, %s121
      %s124 = sphi 0, %s123
      %s138 = sphi 0, %s124
      %s142 = sphi 0, %s142
      %s144 = sphi 0, %s142
      %s145 = sphi 0, %s144
      %s159 = sphi 0, %s145
      %s163 = sphi 0, %s163
      %s165 = sphi 0, %s163
      %s166 = sphi 0, %s165
      %s180 = sphi 0, %s166
      %s184 = sphi 0, %s184
      %s186 = sphi 0, %s184
      %s187 = sphi 0, %s186
      %s201 = sphi 0, %s187
      %s209 = sphi 0, %s211
      %s212 = sphi 0, %s209
      %s213 = sphi 0, %s212
      %s229 = sphi 0, %s213
      %s237 = sphi 0, %s239
      %s240 = sphi 0, %s237
      %s241 = sphi 0, %s240
      %s257 = sphi 0, %s241
      %s265 = sphi 0, %s267
      %s268 = sphi 0, %s265
      %s269 = sphi 0, %s268
      %s285 = sphi 0, %s269
    $region4: #{tpu_custom_call.1} parent=1 // loop_header_branch
      %25 = sbr.rel (%p23) target = $region8
    $region5: #{tpu_custom_call.1} parent=1 // loop_body
      %s27 = ssub.s32 %s22, 1
      %s28 = ssub.s32 %s22, 2
      %s38 = sadd.s32 1, %s31
      %p39 = scmp.ge.s32.totalorder %s38, 1
      %s40 = scalar_select %p39, 0, %s38
      %s41 = sadd.s32 1, %s30
      %s42 = scalar_select %p39, %s41, %s30
      %p43 = scmp.ge.s32.totalorder %s42, 1
      %s44 = scalar_select %p43, 0, %s42
      %s45 = sadd.s32 1, %s29
      %s46 = scalar_select %p43, %s45, %s29
      %p47 = scmp.ge.s32.totalorder %s46, 2
      %s48 = scalar_select %p47, 0, %s46
      %s49 = ssub.s32 %s29, %s48
      %s50 = ssub.s32 %s30, %s44
      %s51 = sor.u32 %s49, %s50
      %s52 = ssub.s32 %s31, %s40
      %s53 = sor.u32 %s51, %s52
      %p54 = scmp.eq.s32.totalorder %s53, 0
      %s56 = sadd.s32 %s55, 1
      %s57 = scalar_select %p54, %s55, %s56
      %p60 = pneg %p54
      %p61 = scmp.eq.s32.totalorder %s22, 1
      %p62 = por %p60, %p61
      %p63 = scmp.ne.s32.totalorder %s55, %s58
      %p64 = scmp.eq.s32.totalorder %s22, 0
      %p65 = por %p63, %p64
      %p66 = scmp.ne.s32.totalorder %s55, %s58
      %p67 = scmp.eq.s32.totalorder %s27, 1
      %p68 = por %p66, %p67
      %p69 = scmp.ne.s32.totalorder %s58, %s59
      %p70 = scmp.eq.s32.totalorder %s27, 0
      %p71 = por %p69, %p70
      %p72 = scmp.ne.s32.totalorder %s58, %s59
      %p73 = scmp.eq.s32.totalorder %s28, 1
      %p74 = por %p72, %p73
      %p76 = scmp.ne.s32.totalorder %s59, %s75
      %p77 = scmp.eq.s32.totalorder %s28, 0
      %p78 = por %p76, %p77
      %s80 = sadd.s32 %s79, 1
      %p83 = scmp.eq.s32.totalorder %s22, 1
      %p84 = scmp.ne.s32.totalorder %s79, %s81
      %p85 = scmp.eq.s32.totalorder %s22, 0
      %p86 = por %p84, %p85
      %p87 = scmp.ne.s32.totalorder %s79, %s81
      %p88 = scmp.eq.s32.totalorder %s27, 1
      %p89 = por %p87, %p88
      %p90 = scmp.ne.s32.totalorder %s81, %s82
      %p91 = scmp.eq.s32.totalorder %s27, 0
      %p92 = por %p90, %p91
      %p93 = scmp.ne.s32.totalorder %s81, %s82
      %p94 = scmp.eq.s32.totalorder %s28, 1
      %p95 = por %p93, %p94
      %p97 = scmp.ne.s32.totalorder %s82, %s96
      %p98 = scmp.eq.s32.totalorder %s28, 0
      %p99 = por %p97, %p98
      %s101 = sadd.s32 %s100, 1
      %p104 = scmp.eq.s32.totalorder %s22, 1
      %p105 = scmp.ne.s32.totalorder %s100, %s102
      %p106 = scmp.eq.s32.totalorder %s22, 0
      %p107 = por %p105, %p106
      %p108 = scmp.ne.s32.totalorder %s100, %s102
      %p109 = scmp.eq.s32.totalorder %s27, 1
      %p110 = por %p108, %p109
      %p111 = scmp.ne.s32.totalorder %s102, %s103
      %p112 = scmp.eq.s32.totalorder %s27, 0
      %p113 = por %p111, %p112
      %p114 = scmp.ne.s32.totalorder %s102, %s103
      %p115 = scmp.eq.s32.totalorder %s28, 1
      %p116 = por %p114, %p115
      %p118 = scmp.ne.s32.totalorder %s103, %s117
      %p119 = scmp.eq.s32.totalorder %s28, 0
      %p120 = por %p118, %p119
      %s122 = sadd.s32 %s121, 1
      %p125 = scmp.eq.s32.totalorder %s22, 1
      %p126 = scmp.ne.s32.totalorder %s121, %s123
      %p127 = scmp.eq.s32.totalorder %s22, 0
      %p128 = por %p126, %p127
      %p129 = scmp.ne.s32.totalorder %s121, %s123
      %p130 = scmp.eq.s32.totalorder %s27, 1
      %p131 = por %p129, %p130
      %p132 = scmp.ne.s32.totalorder %s123, %s124
      %p133 = scmp.eq.s32.totalorder %s27, 0
      %p134 = por %p132, %p133
      %p135 = scmp.ne.s32.totalorder %s123, %s124
      %p136 = scmp.eq.s32.totalorder %s28, 1
      %p137 = por %p135, %p136
      %p139 = scmp.ne.s32.totalorder %s124, %s138
      %p140 = scmp.eq.s32.totalorder %s28, 0
      %p141 = por %p139, %p140
      %s143 = sadd.s32 %s142, 1
      %p146 = scmp.eq.s32.totalorder %s22, 1
      %p147 = scmp.ne.s32.totalorder %s142, %s144
      %p148 = scmp.eq.s32.totalorder %s22, 0
      %p149 = por %p147, %p148
      %p150 = scmp.ne.s32.totalorder %s142, %s144
      %p151 = scmp.eq.s32.totalorder %s27, 1
      %p152 = por %p150, %p151
      %p153 = scmp.ne.s32.totalorder %s144, %s145
      %p154 = scmp.eq.s32.totalorder %s27, 0
      %p155 = por %p153, %p154
      %p156 = scmp.ne.s32.totalorder %s144, %s145
      %p157 = scmp.eq.s32.totalorder %s28, 1
      %p158 = por %p156, %p157
      %p160 = scmp.ne.s32.totalorder %s145, %s159
      %p161 = scmp.eq.s32.totalorder %s28, 0
      %p162 = por %p160, %p161
      %s164 = sadd.s32 %s163, 1
      %p167 = scmp.eq.s32.totalorder %s22, 1
      %p168 = scmp.ne.s32.totalorder %s163, %s165
      %p169 = scmp.eq.s32.totalorder %s22, 0
      %p170 = por %p168, %p169
      %p171 = scmp.ne.s32.totalorder %s163, %s165
      %p172 = scmp.eq.s32.totalorder %s27, 1
      %p173 = por %p171, %p172
      %p174 = scmp.ne.s32.totalorder %s165, %s166
      %p175 = scmp.eq.s32.totalorder %s27, 0
      %p176 = por %p174, %p175
      %p177 = scmp.ne.s32.totalorder %s165, %s166
      %p178 = scmp.eq.s32.totalorder %s28, 1
      %p179 = por %p177, %p178
      %p181 = scmp.ne.s32.totalorder %s166, %s180
      %p182 = scmp.eq.s32.totalorder %s28, 0
      %p183 = por %p181, %p182
      %s185 = sadd.s32 %s184, 1
      %p188 = scmp.eq.s32.totalorder %s22, 1
      %p189 = scmp.ne.s32.totalorder %s184, %s186
      %p190 = scmp.eq.s32.totalorder %s22, 0
      %p191 = por %p189, %p190
      %p192 = scmp.ne.s32.totalorder %s184, %s186
      %p193 = scmp.eq.s32.totalorder %s27, 1
      %p194 = por %p192, %p193
      %p195 = scmp.ne.s32.totalorder %s186, %s187
      %p196 = scmp.eq.s32.totalorder %s27, 0
      %p197 = por %p195, %p196
      %p198 = scmp.ne.s32.totalorder %s186, %s187
      %p199 = scmp.eq.s32.totalorder %s28, 1
      %p200 = por %p198, %p199
      %p202 = scmp.ne.s32.totalorder %s187, %s201
      %p203 = scmp.eq.s32.totalorder %s28, 0
      %p204 = por %p202, %p203
      %s205 = ssub.s32 %s29, %s48
      %s206 = ssub.s32 %s30, %s44
      %s207 = sor.u32 %s205, %s206
      %p208 = scmp.eq.s32.totalorder %s207, 0
      %s210 = sadd.s32 %s209, 1
      %s211 = scalar_select %p208, %s209, %s210
      %p214 = pneg %p208
      %p215 = scmp.eq.s32.totalorder %s22, 1
      %p216 = por %p214, %p215
      %p217 = scmp.ne.s32.totalorder %s209, %s212
      %p218 = scmp.eq.s32.totalorder %s22, 0
      %p219 = por %p217, %p218
      %p220 = scmp.ne.s32.totalorder %s209, %s212
      %p221 = scmp.eq.s32.totalorder %s27, 1
      %p222 = por %p220, %p221
      %p223 = scmp.ne.s32.totalorder %s212, %s213
      %p224 = scmp.eq.s32.totalorder %s27, 0
      %p225 = por %p223, %p224
      %p226 = scmp.ne.s32.totalorder %s212, %s213
      %p227 = scmp.eq.s32.totalorder %s28, 1
      %p228 = por %p226, %p227
      %p230 = scmp.ne.s32.totalorder %s213, %s229
      %p231 = scmp.eq.s32.totalorder %s28, 0
      %p232 = por %p230, %p231
      %s233 = ssub.s32 %s29, %s48
      %s234 = ssub.s32 %s30, %s44
      %s235 = sor.u32 %s233, %s234
      %p236 = scmp.eq.s32.totalorder %s235, 0
      %s238 = sadd.s32 %s237, 1
      %s239 = scalar_select %p236, %s237, %s238
      %p242 = pneg %p236
      %p243 = scmp.eq.s32.totalorder %s22, 1
      %p244 = por %p242, %p243
      %p245 = scmp.ne.s32.totalorder %s237, %s240
      %p246 = scmp.eq.s32.totalorder %s22, 0
      %p247 = por %p245, %p246
      %p248 = scmp.ne.s32.totalorder %s237, %s240
      %p249 = scmp.eq.s32.totalorder %s27, 1
      %p250 = por %p248, %p249
      %p251 = scmp.ne.s32.totalorder %s240, %s241
      %p252 = scmp.eq.s32.totalorder %s27, 0
      %p253 = por %p251, %p252
      %p254 = scmp.ne.s32.totalorder %s240, %s241
      %p255 = scmp.eq.s32.totalorder %s28, 1
      %p256 = por %p254, %p255
      %p258 = scmp.ne.s32.totalorder %s241, %s257
      %p259 = scmp.eq.s32.totalorder %s28, 0
      %p260 = por %p258, %p259
      %s261 = ssub.s32 %s29, %s48
      %s262 = ssub.s32 %s30, %s44
      %s263 = sor.u32 %s261, %s262
      %p264 = scmp.eq.s32.totalorder %s263, 0
      %s266 = sadd.s32 %s265, 1
      %s267 = scalar_select %p264, %s265, %s266
      %p270 = pneg %p264
      %p271 = scmp.eq.s32.totalorder %s22, 1
      %p272 = por %p270, %p271
      %p273 = scmp.ne.s32.totalorder %s265, %s268
      %p274 = scmp.eq.s32.totalorder %s22, 0
      %p275 = por %p273, %p274
      %p276 = scmp.ne.s32.totalorder %s265, %s268
      %p277 = scmp.eq.s32.totalorder %s27, 1
      %p278 = por %p276, %p277
      %p279 = scmp.ne.s32.totalorder %s268, %s269
      %p280 = scmp.eq.s32.totalorder %s27, 0
      %p281 = por %p279, %p280
      %p282 = scmp.ne.s32.totalorder %s268, %s269
      %p283 = scmp.eq.s32.totalorder %s28, 1
      %p284 = por %p282, %p283
      %p286 = scmp.ne.s32.totalorder %s269, %s285
      %p287 = scmp.eq.s32.totalorder %s28, 0
      %p288 = por %p286, %p287
      %p289 = scmp.le.s32.totalorder 1, %s22
      %p290 = scmp.lt.s32.totalorder %s22, 3
      %p291 = pnand %p289, %p290
      %p292 = pneg %p291
      // Predicated region
      $region9: #{tpu_custom_call.1} parent=5 // pred_check
        _
      $region10: #{tpu_custom_call.1} parent=5 // pred_check_branch
        %294 = sbr.rel (%p291) target = $region12
      $region11: #{tpu_custom_call.1} parent=5 // pred_region
        %s295 = ssub.s32 %s22, 1
        // Predicated region
        $region13: #{tpu_custom_call.1} parent=11 // pred_check
          %p296 = pneg %p92
        $region14: #{tpu_custom_call.1} parent=11 // pred_check_branch
          %298 = sbr.rel (%p296) target = $region16
        $region15: #{tpu_custom_call.1} parent=11 // pred_region
          _
        $region16: #{tpu_custom_call.1} parent=11 // pred_fallthru
          _
        // Predicated region
        $region17: #{tpu_custom_call.1} parent=11 // pred_check
          %p299 = pneg %p113
        $region18: #{tpu_custom_call.1} parent=11 // pred_check_branch
          %301 = sbr.rel (%p299) target = $region20
        $region19: #{tpu_custom_call.1} parent=11 // pred_region
          _
        $region20: #{tpu_custom_call.1} parent=11 // pred_fallthru
          _
        // Predicated region
        $region21: #{tpu_custom_call.1} parent=11 // pred_check
          %p302 = pneg %p134
        $region22: #{tpu_custom_call.1} parent=11 // pred_check_branch
          %304 = sbr.rel (%p302) target = $region24
        $region23: #{tpu_custom_call.1} parent=11 // pred_region
          _
        $region24: #{tpu_custom_call.1} parent=11 // pred_fallthru
          _
        // Predicated region
        $region25: #{tpu_custom_call.1} parent=11 // pred_check
          %p305 = pneg %p155
        $region26: #{tpu_custom_call.1} parent=11 // pred_check_branch
          %307 = sbr.rel (%p305) target = $region28
        $region27: #{tpu_custom_call.1} parent=11 // pred_region
          _
        $region28: #{tpu_custom_call.1} parent=11 // pred_fallthru
          _
        // Predicated region
        $region29: #{tpu_custom_call.1} parent=11 // pred_check
          %p308 = pneg %p176
        $region30: #{tpu_custom_call.1} parent=11 // pred_check_branch
          %310 = sbr.rel (%p308) target = $region32
        $region31: #{tpu_custom_call.1} parent=11 // pred_region
          _
        $region32: #{tpu_custom_call.1} parent=11 // pred_fallthru
          _
        // Predicated region
        $region33: #{tpu_custom_call.1} parent=11 // pred_check
          %p311 = pneg %p197
        $region34: #{tpu_custom_call.1} parent=11 // pred_check_branch
          %313 = sbr.rel (%p311) target = $region36
        $region35: #{tpu_custom_call.1} parent=11 // pred_region
          _
        $region36: #{tpu_custom_call.1} parent=11 // pred_fallthru
          _
      $region12: #{tpu_custom_call.1} parent=5 // pred_fallthru
        _
      %p314 = scmp.lt.s32.totalorder %s22, 2
      // Predicated region
      $region37: #{tpu_custom_call.1} parent=5 // pred_check
        %p315 = pneg %p314
      $region38: #{tpu_custom_call.1} parent=5 // pred_check_branch
        %317 = sbr.rel (%p315) target = $region40
      $region39: #{tpu_custom_call.1} parent=5 // pred_region
        // Predicated region
        $region41: #{tpu_custom_call.1} parent=39 // pred_check
          %p318 = pneg %p65
        $region42: #{tpu_custom_call.1} parent=39 // pred_check_branch
          %320 = sbr.rel (%p318) target = $region44
        $region43: #{tpu_custom_call.1} parent=39 // pred_region
          %p321 = scmp.lt.s32.totalorder %s29, 1
          %s322 = scalar_select %p321, %s29, 1
          %p323 = scmp.lt.s32.totalorder %s30, 0
          %s324 = scalar_select %p323, %s30, 0
          %p325 = scmp.lt.s32.totalorder %s31, 0
          %s326 = scalar_select %p325, %s31, 0
          %s327 = sadd.s32 %s326, %s324
          %s328 = sadd.s32 %s327, %s322
          %s329 = smul.addr %s328, 8
          %s330 = scalar_lea.vmem %s0, %s329
        $region44: #{tpu_custom_call.1} parent=39 // pred_fallthru
          _
      $region40: #{tpu_custom_call.1} parent=5 // pred_fallthru
        _
      %p331 = scmp.le.s32.totalorder 1, %s22
      %p332 = scmp.lt.s32.totalorder %s22, 3
      %p333 = pnand %p331, %p332
      %p334 = pneg %p333
      // Predicated region
      $region45: #{tpu_custom_call.1} parent=5 // pred_check
        _
      $region46: #{tpu_custom_call.1} parent=5 // pred_check_branch
        %336 = sbr.rel (%p333) target = $region48
      $region47: #{tpu_custom_call.1} parent=5 // pred_region
        %s337 = ssub.s32 %s22, 1
        %p338 = scmp.lt.s32.totalorder %s32, 1
        %s339 = scalar_select %p338, %s32, 1
        %p340 = scmp.lt.s32.totalorder %s33, 0
        %s341 = scalar_select %p340, %s33, 0
        %p342 = scmp.lt.s32.totalorder %s34, 0
        %s343 = scalar_select %p342, %s34, 0
        %s344 = sadd.s32 %s343, %s341
        %s345 = sadd.s32 %s344, %s339
        %s346 = smul.addr %s345, 8
        %s347 = scalar_lea.vmem %s0, %s346
        %p348 = pneg %p71
        %p349 = pneg %p68
        %p350 = pneg %p92
        %p351 = pneg %p89
        %p352 = pneg %p113
        %p353 = pneg %p110
        %p354 = pneg %p134
        %p355 = pneg %p131
        %p356 = pneg %p155
        %p357 = pneg %p152
        %p358 = pneg %p176
        %p359 = pneg %p173
        %p360 = pneg %p197
        %p361 = pneg %p194
        %p362 = pneg %p225
        %p363 = pneg %p222
        %s364 = sand.u32 %s212, 1
        %s365 = scalar_lea.sflag [#allocation6], %s364
        %s366 = sand.u32 %s212, 1
        %s367 = smul.addr %s366, 32
        %s368 = scalar_lea.vmem [#allocation5], %s367
        %p369 = pneg %p253
        %p370 = pneg %p250
        %s371 = sand.u32 %s27, 1
        %s372 = scalar_lea.sflag [#allocation8], %s371
        %s373 = sand.u32 %s240, 1
        %s374 = smul.addr %s373, 32
        %s375 = scalar_lea.vmem [#allocation7], %s374
        %p376 = pneg %p281
        %p377 = pneg %p278
        %s378 = sand.u32 %s27, 1
        %s379 = scalar_lea.sflag [#allocation8], %s378
        %s380 = sand.u32 %s268, 1
        %s381 = smul.addr %s380, 32
        %s382 = scalar_lea.vmem [#allocation9], %s381
        %p383 = scmp.lt.s32.totalorder %s32, 1
        %s384 = scalar_select %p383, %s32, 1
        %p385 = scmp.lt.s32.totalorder %s33, 0
        %s386 = scalar_select %p385, %s33, 0
        %p387 = scmp.lt.s32.totalorder %s34, 0
        %s388 = scalar_select %p387, %s34, 0
        %s389 = sadd.s32 %s388, %s386
        %s390 = sadd.s32 %s389, %s384
        %s391 = smul.addr %s390, 8
        %s392 = scalar_lea.vmem %s0, %s391
        %p393 = scmp.eq.s32.totalorder %s34, 0
        // Predicated region
        $region49: #{tpu_custom_call.1} parent=47 // pred_check
          %p394 = pneg %p393
        $region50: #{tpu_custom_call.1} parent=47 // pred_check_branch
          %396 = sbr.rel (%p394) target = $region52
        $region51: #{tpu_custom_call.1} parent=47 // pred_region
          %vm397 = vcmask 64512
          %398 = vst.msk [vmem:[#allocation2] sm:$0xff] %vm397, 0.0
          %399 = vst.msk [vmem:[#allocation2 + $0x8] sm:$0xff] %vm397, 0.0
          %400 = vst.msk [vmem:[#allocation2 + $0x10] sm:$0xff] %vm397, 0.0
          %401 = vst.msk [vmem:[#allocation2 + $0x18] sm:$0xff] %vm397, 0.0
          %402 = vst.msk [vmem:[#allocation3] sm:$0xff] %vm397, 0.0
          %403 = vst.msk [vmem:[#allocation3 + $0x8] sm:$0xff] %vm397, 0.0
          %404 = vst.msk [vmem:[#allocation3 + $0x10] sm:$0xff] %vm397, 0.0
          %405 = vst.msk [vmem:[#allocation3 + $0x18] sm:$0xff] %vm397, 0.0
          %406 = vst.msk [vmem:[#allocation4] sm:$0xff] %vm397, 0.0
          %407 = vst.msk [vmem:[#allocation4 + $0x8] sm:$0xff] %vm397, 0.0
          %408 = vst.msk [vmem:[#allocation4 + $0x10] sm:$0xff] %vm397, 0.0
          %409 = vst.msk [vmem:[#allocation4 + $0x18] sm:$0xff] %vm397, 0.0
        $region52: #{tpu_custom_call.1} parent=47 // pred_fallthru
          _
        %v410 = vld [vmem:[%s392] sm:$0xff]
        %v411 = vld [vmem:[#allocation2] sm:$0xff]
        %v412 = vld [vmem:[%s1] sm:$0xff]
        %v413 = vld [vmem:[%s1 + $0x8] sm:$0xff]
        %v414 = vld [vmem:[%s1 + $0x10] sm:$0xff]
        %v415 = vld [vmem:[%s1 + $0x18] sm:$0xff]
        %vm416 = vcmask 261120
        %v418 = vsel %vm416, %v410, 0
        %420 = vmatpush.msra.mxu0 0.0
        %421 = vmatpush.msra.mxu0 0.0
        %422 = vmatpush.msra.mxu0 0.0
        %423 = vmatpush.msra.mxu0 0.0
        %424 = vmatpush.msra.mxu0 0.0
        %425 = vmatpush.msra.mxu0 0.0
        %426 = vmatpush.msra.mxu0 0.0
        %427 = vmatpush.msra.mxu0 0.0
        %428 = vmatpush.msra.mxu0 0.0
        %429 = vmatpush.msra.mxu0 0.0
        %430 = vmatpush.msra.mxu0 0.0
        %431 = vmatpush.msra.mxu0 0.0
        %432 = vmatpush.msra.mxu0 %v415
        %433 = vmatpush.msra.mxu0 %v414
        %434 = vmatpush.msra.mxu0 %v413
        %435 = vmatpush.msra.mxu0 %v412
        %436 = vmatmul.f32.gmra.mxu0 %v418
        %v437 = vpop.f32.mrf.mxu0
        %v438 = vadd.f32 0.0, %v437
        %439 = vdwg.mxu0
        %v440 = vadd.f32 %v411, %v438
        %vm441 = vcmask 64512
        %442 = vst.msk [vmem:[#allocation2] sm:$0xff] %vm441, %v440
        %v443 = vld [vmem:[#allocation3] sm:$0xff]
        %v444 = vld [vmem:[%s2] sm:$0xff]
        %v445 = vld [vmem:[%s2 + $0x8] sm:$0xff]
        %v446 = vld [vmem:[%s2 + $0x10] sm:$0xff]
        %v447 = vld [vmem:[%s2 + $0x18] sm:$0xff]
        %448 = vmatpush.msra.mxu0 0.0
        %449 = vmatpush.msra.mxu0 0.0
        %450 = vmatpush.msra.mxu0 0.0
        %451 = vmatpush.msra.mxu0 0.0
        %452 = vmatpush.msra.mxu0 0.0
        %453 = vmatpush.msra.mxu0 0.0
        %454 = vmatpush.msra.mxu0 0.0
        %455 = vmatpush.msra.mxu0 0.0
        %456 = vmatpush.msra.mxu0 0.0
        %457 = vmatpush.msra.mxu0 0.0
        %458 = vmatpush.msra.mxu0 0.0
        %459 = vmatpush.msra.mxu0 0.0
        %460 = vmatpush.msra.mxu0 %v447
        %461 = vmatpush.msra.mxu0 %v446
        %462 = vmatpush.msra.mxu0 %v445
        %463 = vmatpush.msra.mxu0 %v444
        %464 = vmatmul.f32.gmra.mxu0 %v418
        %v465 = vpop.f32.mrf.mxu0
        %v466 = vadd.f32 0.0, %v465
        %467 = vdwg.mxu0
        %v468 = vadd.f32 %v443, %v466
        %469 = vst.msk [vmem:[#allocation3] sm:$0xff] %vm441, %v468
        %v470 = vld [vmem:[#allocation4] sm:$0xff]
        %v471 = vld [vmem:[%s3] sm:$0xff]
        %v472 = vld [vmem:[%s3 + $0x8] sm:$0xff]
        %v473 = vld [vmem:[%s3 + $0x10] sm:$0xff]
        %v474 = vld [vmem:[%s3 + $0x18] sm:$0xff]
        %475 = vmatpush.msra.mxu0 0.0
        %476 = vmatpush.msra.mxu0 0.0
        %477 = vmatpush.msra.mxu0 0.0
        %478 = vmatpush.msra.mxu0 0.0
        %479 = vmatpush.msra.mxu0 0.0
        %480 = vmatpush.msra.mxu0 0.0
        %481 = vmatpush.msra.mxu0 0.0
        %482 = vmatpush.msra.mxu0 0.0
        %483 = vmatpush.msra.mxu0 0.0
        %484 = vmatpush.msra.mxu0 0.0
        %485 = vmatpush.msra.mxu0 0.0
        %486 = vmatpush.msra.mxu0 0.0
        %487 = vmatpush.msra.mxu0 %v474
        %488 = vmatpush.msra.mxu0 %v473
        %489 = vmatpush.msra.mxu0 %v472
        %490 = vmatpush.msra.mxu0 %v471
        %491 = vmatmul.f32.gmra.mxu0 %v418
        %v492 = vpop.f32.mrf.mxu0
        %v493 = vadd.f32 0.0, %v492
        %494 = vdwg.mxu0
        %v495 = vadd.f32 %v470, %v493
        %496 = vst.msk [vmem:[#allocation4] sm:$0xff] %vm441, %v495
        %s497 = scalar_lea.vmem [#allocation2], 8
        %v498 = vld [vmem:[%s497] sm:$0xff]
        %s499 = scalar_lea.vmem %s1, 32
        %v500 = vld [vmem:[%s499] sm:$0xff]
        %v501 = vld [vmem:[%s499 + $0x8] sm:$0xff]
        %v502 = vld [vmem:[%s499 + $0x10] sm:$0xff]
        %v503 = vld [vmem:[%s499 + $0x18] sm:$0xff]
        %504 = vmatpush.msra.mxu0 0.0
        %505 = vmatpush.msra.mxu0 0.0
        %506 = vmatpush.msra.mxu0 0.0
        %507 = vmatpush.msra.mxu0 0.0
        %508 = vmatpush.msra.mxu0 0.0
        %509 = vmatpush.msra.mxu0 0.0
        %510 = vmatpush.msra.mxu0 0.0
        %511 = vmatpush.msra.mxu0 0.0
        %512 = vmatpush.msra.mxu0 0.0
        %513 = vmatpush.msra.mxu0 0.0
        %514 = vmatpush.msra.mxu0 0.0
        %515 = vmatpush.msra.mxu0 0.0
        %516 = vmatpush.msra.mxu0 %v503
        %517 = vmatpush.msra.mxu0 %v502
        %518 = vmatpush.msra.mxu0 %v501
        %519 = vmatpush.msra.mxu0 %v500
        %520 = vmatmul.f32.gmra.mxu0 %v418
        %v521 = vpop.f32.mrf.mxu0
        %v522 = vadd.f32 0.0, %v521
        %523 = vdwg.mxu0
        %v524 = vadd.f32 %v498, %v522
        %525 = vst.msk [vmem:[%s497] sm:$0xff] %vm441, %v524
        %s526 = scalar_lea.vmem [#allocation3], 8
        %v527 = vld [vmem:[%s526] sm:$0xff]
        %s528 = scalar_lea.vmem %s2, 32
        %v529 = vld [vmem:[%s528] sm:$0xff]
        %v530 = vld [vmem:[%s528 + $0x8] sm:$0xff]
        %v531 = vld [vmem:[%s528 + $0x10] sm:$0xff]
        %v532 = vld [vmem:[%s528 + $0x18] sm:$0xff]
        %533 = vmatpush.msra.mxu0 0.0
        %534 = vmatpush.msra.mxu0 0.0
        %535 = vmatpush.msra.mxu0 0.0
        %536 = vmatpush.msra.mxu0 0.0
        %537 = vmatpush.msra.mxu0 0.0
        %538 = vmatpush.msra.mxu0 0.0
        %539 = vmatpush.msra.mxu0 0.0
        %540 = vmatpush.msra.mxu0 0.0
        %541 = vmatpush.msra.mxu0 0.0
        %542 = vmatpush.msra.mxu0 0.0
        %543 = vmatpush.msra.mxu0 0.0
        %544 = vmatpush.msra.mxu0 0.0
        %545 = vmatpush.msra.mxu0 %v532
        %546 = vmatpush.msra.mxu0 %v531
        %547 = vmatpush.msra.mxu0 %v530
        %548 = vmatpush.msra.mxu0 %v529
        %549 = vmatmul.f32.gmra.mxu0 %v418
        %v550 = vpop.f32.mrf.mxu0
        %v551 = vadd.f32 0.0, %v550
        %552 = vdwg.mxu0
        %v553 = vadd.f32 %v527, %v551
        %554 = vst.msk [vmem:[%s526] sm:$0xff] %vm441, %v553
        %s555 = scalar_lea.vmem [#allocation4], 8
        %v556 = vld [vmem:[%s555] sm:$0xff]
        %s557 = scalar_lea.vmem %s3, 32
        %v558 = vld [vmem:[%s557] sm:$0xff]
        %v559 = vld [vmem:[%s557 + $0x8] sm:$0xff]
        %v560 = vld [vmem:[%s557 + $0x10] sm:$0xff]
        %v561 = vld [vmem:[%s557 + $0x18] sm:$0xff]
        %562 = vmatpush.msra.mxu0 0.0
        %563 = vmatpush.msra.mxu0 0.0
        %564 = vmatpush.msra.mxu0 0.0
        %565 = vmatpush.msra.mxu0 0.0
        %566 = vmatpush.msra.mxu0 0.0
        %567 = vmatpush.msra.mxu0 0.0
        %568 = vmatpush.msra.mxu0 0.0
        %569 = vmatpush.msra.mxu0 0.0
        %570 = vmatpush.msra.mxu0 0.0
        %571 = vmatpush.msra.mxu0 0.0
        %572 = vmatpush.msra.mxu0 0.0
        %573 = vmatpush.msra.mxu0 0.0
        %574 = vmatpush.msra.mxu0 %v561
        %575 = vmatpush.msra.mxu0 %v560
        %576 = vmatpush.msra.mxu0 %v559
        %577 = vmatpush.msra.mxu0 %v558
        %578 = vmatmul.f32.gmra.mxu0 %v418
        %v579 = vpop.f32.mrf.mxu0
        %v580 = vadd.f32 0.0, %v579
        %581 = vdwg.mxu0
        %v582 = vadd.f32 %v556, %v580
        %583 = vst.msk [vmem:[%s555] sm:$0xff] %vm441, %v582
        %s584 = scalar_lea.vmem [#allocation2], 16
        %v585 = vld [vmem:[%s584] sm:$0xff]
        %s586 = scalar_lea.vmem %s1, 64
        %v587 = vld [vmem:[%s586] sm:$0xff]
        %v588 = vld [vmem:[%s586 + $0x8] sm:$0xff]
        %v589 = vld [vmem:[%s586 + $0x10] sm:$0xff]
        %v590 = vld [vmem:[%s586 + $0x18] sm:$0xff]
        %591 = vmatpush.msra.mxu0 0.0
        %592 = vmatpush.msra.mxu0 0.0
        %593 = vmatpush.msra.mxu0 0.0
        %594 = vmatpush.msra.mxu0 0.0
        %595 = vmatpush.msra.mxu0 0.0
        %596 = vmatpush.msra.mxu0 0.0
        %597 = vmatpush.msra.mxu0 0.0
        %598 = vmatpush.msra.mxu0 0.0
        %599 = vmatpush.msra.mxu0 0.0
        %600 = vmatpush.msra.mxu0 0.0
        %601 = vmatpush.msra.mxu0 0.0
        %602 = vmatpush.msra.mxu0 0.0
        %603 = vmatpush.msra.mxu0 %v590
        %604 = vmatpush.msra.mxu0 %v589
        %605 = vmatpush.msra.mxu0 %v588
        %606 = vmatpush.msra.mxu0 %v587
        %607 = vmatmul.f32.gmra.mxu0 %v418
        %v608 = vpop.f32.mrf.mxu0
        %v609 = vadd.f32 0.0, %v608
        %610 = vdwg.mxu0
        %v611 = vadd.f32 %v585, %v609
        %612 = vst.msk [vmem:[%s584] sm:$0xff] %vm441, %v611
        %s613 = scalar_lea.vmem [#allocation3], 16
        %v614 = vld [vmem:[%s613] sm:$0xff]
        %s615 = scalar_lea.vmem %s2, 64
        %v616 = vld [vmem:[%s615] sm:$0xff]
        %v617 = vld [vmem:[%s615 + $0x8] sm:$0xff]
        %v618 = vld [vmem:[%s615 + $0x10] sm:$0xff]
        %v619 = vld [vmem:[%s615 + $0x18] sm:$0xff]
        %620 = vmatpush.msra.mxu0 0.0
        %621 = vmatpush.msra.mxu0 0.0
        %622 = vmatpush.msra.mxu0 0.0
        %623 = vmatpush.msra.mxu0 0.0
        %624 = vmatpush.msra.mxu0 0.0
        %625 = vmatpush.msra.mxu0 0.0
        %626 = vmatpush.msra.mxu0 0.0
        %627 = vmatpush.msra.mxu0 0.0
        %628 = vmatpush.msra.mxu0 0.0
        %629 = vmatpush.msra.mxu0 0.0
        %630 = vmatpush.msra.mxu0 0.0
        %631 = vmatpush.msra.mxu0 0.0
        %632 = vmatpush.msra.mxu0 %v619
        %633 = vmatpush.msra.mxu0 %v618
        %634 = vmatpush.msra.mxu0 %v617
        %635 = vmatpush.msra.mxu0 %v616
        %636 = vmatmul.f32.gmra.mxu0 %v418
        %v637 = vpop.f32.mrf.mxu0
        %v638 = vadd.f32 0.0, %v637
        %639 = vdwg.mxu0
        %v640 = vadd.f32 %v614, %v638
        %641 = vst.msk [vmem:[%s613] sm:$0xff] %vm441, %v640
        %s642 = scalar_lea.vmem [#allocation4], 16
        %v643 = vld [vmem:[%s642] sm:$0xff]
        %s644 = scalar_lea.vmem %s3, 64
        %v645 = vld [vmem:[%s644] sm:$0xff]
        %v646 = vld [vmem:[%s644 + $0x8] sm:$0xff]
        %v647 = vld [vmem:[%s644 + $0x10] sm:$0xff]
        %v648 = vld [vmem:[%s644 + $0x18] sm:$0xff]
        %649 = vmatpush.msra.mxu0 0.0
        %650 = vmatpush.msra.mxu0 0.0
        %651 = vmatpush.msra.mxu0 0.0
        %652 = vmatpush.msra.mxu0 0.0
        %653 = vmatpush.msra.mxu0 0.0
        %654 = vmatpush.msra.mxu0 0.0
        %655 = vmatpush.msra.mxu0 0.0
        %656 = vmatpush.msra.mxu0 0.0
        %657 = vmatpush.msra.mxu0 0.0
        %658 = vmatpush.msra.mxu0 0.0
        %659 = vmatpush.msra.mxu0 0.0
        %660 = vmatpush.msra.mxu0 0.0
        %661 = vmatpush.msra.mxu0 %v648
        %662 = vmatpush.msra.mxu0 %v647
        %663 = vmatpush.msra.mxu0 %v646
        %664 = vmatpush.msra.mxu0 %v645
        %665 = vmatmul.f32.gmra.mxu0 %v418
        %v666 = vpop.f32.mrf.mxu0
        %v667 = vadd.f32 0.0, %v666
        %668 = vdwg.mxu0
        %v669 = vadd.f32 %v643, %v667
        %670 = vst.msk [vmem:[%s642] sm:$0xff] %vm441, %v669
        %s671 = scalar_lea.vmem [#allocation2], 24
        %v672 = vld [vmem:[%s671] sm:$0xff]
        %s673 = scalar_lea.vmem %s1, 96
        %v674 = vld [vmem:[%s673] sm:$0xff]
        %v675 = vld [vmem:[%s673 + $0x8] sm:$0xff]
        %v676 = vld [vmem:[%s673 + $0x10] sm:$0xff]
        %v677 = vld [vmem:[%s673 + $0x18] sm:$0xff]
        %678 = vmatpush.msra.mxu0 0.0
        %679 = vmatpush.msra.mxu0 0.0
        %680 = vmatpush.msra.mxu0 0.0
        %681 = vmatpush.msra.mxu0 0.0
        %682 = vmatpush.msra.mxu0 0.0
        %683 = vmatpush.msra.mxu0 0.0
        %684 = vmatpush.msra.mxu0 0.0
        %685 = vmatpush.msra.mxu0 0.0
        %686 = vmatpush.msra.mxu0 0.0
        %687 = vmatpush.msra.mxu0 0.0
        %688 = vmatpush.msra.mxu0 0.0
        %689 = vmatpush.msra.mxu0 0.0
        %690 = vmatpush.msra.mxu0 %v677
        %691 = vmatpush.msra.mxu0 %v676
        %692 = vmatpush.msra.mxu0 %v675
        %693 = vmatpush.msra.mxu0 %v674
        %694 = vmatmul.f32.gmra.mxu0 %v418
        %v695 = vpop.f32.mrf.mxu0
        %v696 = vadd.f32 0.0, %v695
        %697 = vdwg.mxu0
        %v698 = vadd.f32 %v672, %v696
        %699 = vst.msk [vmem:[%s671] sm:$0xff] %vm441, %v698
        %s700 = scalar_lea.vmem [#allocation3], 24
        %v701 = vld [vmem:[%s700] sm:$0xff]
        %s702 = scalar_lea.vmem %s2, 96
        %v703 = vld [vmem:[%s702] sm:$0xff]
        %v704 = vld [vmem:[%s702 + $0x8] sm:$0xff]
        %v705 = vld [vmem:[%s702 + $0x10] sm:$0xff]
        %v706 = vld [vmem:[%s702 + $0x18] sm:$0xff]
        %707 = vmatpush.msra.mxu0 0.0
        %708 = vmatpush.msra.mxu0 0.0
        %709 = vmatpush.msra.mxu0 0.0
        %710 = vmatpush.msra.mxu0 0.0
        %711 = vmatpush.msra.mxu0 0.0
        %712 = vmatpush.msra.mxu0 0.0
        %713 = vmatpush.msra.mxu0 0.0
        %714 = vmatpush.msra.mxu0 0.0
        %715 = vmatpush.msra.mxu0 0.0
        %716 = vmatpush.msra.mxu0 0.0
        %717 = vmatpush.msra.mxu0 0.0
        %718 = vmatpush.msra.mxu0 0.0
        %719 = vmatpush.msra.mxu0 %v706
        %720 = vmatpush.msra.mxu0 %v705
        %721 = vmatpush.msra.mxu0 %v704
        %722 = vmatpush.msra.mxu0 %v703
        %723 = vmatmul.f32.gmra.mxu0 %v418
        %v724 = vpop.f32.mrf.mxu0
        %v725 = vadd.f32 0.0, %v724
        %726 = vdwg.mxu0
        %v727 = vadd.f32 %v701, %v725
        %728 = vst.msk [vmem:[%s700] sm:$0xff] %vm441, %v727
        %s729 = scalar_lea.vmem [#allocation4], 24
        %v730 = vld [vmem:[%s729] sm:$0xff]
        %s731 = scalar_lea.vmem %s3, 96
        %v732 = vld [vmem:[%s731] sm:$0xff]
        %v733 = vld [vmem:[%s731 + $0x8] sm:$0xff]
        %v734 = vld [vmem:[%s731 + $0x10] sm:$0xff]
        %v735 = vld [vmem:[%s731 + $0x18] sm:$0xff]
        %736 = vmatpush.msra.mxu0 0.0
        %737 = vmatpush.msra.mxu0 0.0
        %738 = vmatpush.msra.mxu0 0.0
        %739 = vmatpush.msra.mxu0 0.0
        %740 = vmatpush.msra.mxu0 0.0
        %741 = vmatpush.msra.mxu0 0.0
        %742 = vmatpush.msra.mxu0 0.0
        %743 = vmatpush.msra.mxu0 0.0
        %744 = vmatpush.msra.mxu0 0.0
        %745 = vmatpush.msra.mxu0 0.0
        %746 = vmatpush.msra.mxu0 0.0
        %747 = vmatpush.msra.mxu0 0.0
        %748 = vmatpush.msra.mxu0 %v735
        %749 = vmatpush.msra.mxu0 %v734
        %750 = vmatpush.msra.mxu0 %v733
        %751 = vmatpush.msra.mxu0 %v732
        %752 = vmatmul.f32.gmra.mxu0 %v418
        %v753 = vpop.f32.mrf.mxu0
        %v754 = vadd.f32 0.0, %v753
        %755 = vdwg.mxu0
        %v756 = vadd.f32 %v730, %v754
        %757 = vst.msk [vmem:[%s729] sm:$0xff] %vm441, %v756
        // Predicated region
        $region53: #{tpu_custom_call.1} parent=47 // pred_check
          %p758 = pneg %p393
        $region54: #{tpu_custom_call.1} parent=47 // pred_check_branch
          %760 = sbr.rel (%p758) target = $region56
        $region55: #{tpu_custom_call.1} parent=47 // pred_region
          %v761 = vld [vmem:[#allocation2] sm:$0xff]
          %v762 = vld [vmem:[#allocation2 + $0x8] sm:$0xff]
          %v763 = vld [vmem:[#allocation2 + $0x10] sm:$0xff]
          %v764 = vld [vmem:[#allocation2 + $0x18] sm:$0xff]
          %v765 = vld [vmem:[%s4] sm:$0x1]
          %v766 = vld [vmem:[%s4 + $0x1] sm:$0x1]
          %v767 = vld [vmem:[%s4 + $0x2] sm:$0x1]
          %v768 = vld [vmem:[%s4 + $0x3] sm:$0x1]
          %v773 = vperm.slane %v765, 0
          %v774 = vperm.slane %v766, 0
          %v775 = vperm.slane %v767, 0
          %v776 = vperm.slane %v768, 0
          %v781 = vadd.f32 %v761, %v773
          %v782 = vadd.f32 %v762, %v774
          %v783 = vadd.f32 %v763, %v775
          %v784 = vadd.f32 %v764, %v776
          %785 = vst.msk [vmem:[%s368] sm:$0xff] %vm441, %v781
          %786 = vst.msk [vmem:[%s368 + $0x8] sm:$0xff] %vm441, %v782
          %787 = vst.msk [vmem:[%s368 + $0x10] sm:$0xff] %vm441, %v783
          %788 = vst.msk [vmem:[%s368 + $0x18] sm:$0xff] %vm441, %v784
          %v789 = vld [vmem:[#allocation3] sm:$0xff]
          %v790 = vld [vmem:[#allocation3 + $0x8] sm:$0xff]
          %v791 = vld [vmem:[#allocation3 + $0x10] sm:$0xff]
          %v792 = vld [vmem:[#allocation3 + $0x18] sm:$0xff]
          %v793 = vld [vmem:[%s5] sm:$0x1]
          %v794 = vld [vmem:[%s5 + $0x1] sm:$0x1]
          %v795 = vld [vmem:[%s5 + $0x2] sm:$0x1]
          %v796 = vld [vmem:[%s5 + $0x3] sm:$0x1]
          %v801 = vperm.slane %v793, 0
          %v802 = vperm.slane %v794, 0
          %v803 = vperm.slane %v795, 0
          %v804 = vperm.slane %v796, 0
          %v809 = vadd.f32 %v789, %v801
          %v810 = vadd.f32 %v790, %v802
          %v811 = vadd.f32 %v791, %v803
          %v812 = vadd.f32 %v792, %v804
          %813 = vst.msk [vmem:[%s375] sm:$0xff] %vm441, %v809
          %814 = vst.msk [vmem:[%s375 + $0x8] sm:$0xff] %vm441, %v810
          %815 = vst.msk [vmem:[%s375 + $0x10] sm:$0xff] %vm441, %v811
          %816 = vst.msk [vmem:[%s375 + $0x18] sm:$0xff] %vm441, %v812
          %v817 = vld [vmem:[#allocation4] sm:$0xff]
          %v818 = vld [vmem:[#allocation4 + $0x8] sm:$0xff]
          %v819 = vld [vmem:[#allocation4 + $0x10] sm:$0xff]
          %v820 = vld [vmem:[#allocation4 + $0x18] sm:$0xff]
          %v821 = vld [vmem:[%s6] sm:$0x1]
          %v822 = vld [vmem:[%s6 + $0x1] sm:$0x1]
          %v823 = vld [vmem:[%s6 + $0x2] sm:$0x1]
          %v824 = vld [vmem:[%s6 + $0x3] sm:$0x1]
          %v829 = vperm.slane %v821, 0
          %v830 = vperm.slane %v822, 0
          %v831 = vperm.slane %v823, 0
          %v832 = vperm.slane %v824, 0
          %v837 = vadd.f32 %v817, %v829
          %v838 = vadd.f32 %v818, %v830
          %v839 = vadd.f32 %v819, %v831
          %v840 = vadd.f32 %v820, %v832
          %841 = vst.msk [vmem:[%s382] sm:$0xff] %vm441, %v837
          %842 = vst.msk [vmem:[%s382 + $0x8] sm:$0xff] %vm441, %v838
          %843 = vst.msk [vmem:[%s382 + $0x10] sm:$0xff] %vm441, %v839
          %844 = vst.msk [vmem:[%s382 + $0x18] sm:$0xff] %vm441, %v840
        $region56: #{tpu_custom_call.1} parent=47 // pred_fallthru
          _
        %s845 = sand.u32 %s212, 1
        %s846 = scalar_lea.sflag [#allocation6], %s845
        %s847 = sand.u32 %s212, 1
        %s848 = smul.addr %s847, 32
        %s849 = scalar_lea.vmem [#allocation5], %s848
        %s850 = sand.u32 %s27, 1
        %s851 = scalar_lea.sflag [#allocation8], %s850
        %s852 = sand.u32 %s240, 1
        %s853 = smul.addr %s852, 32
        %s854 = scalar_lea.vmem [#allocation7], %s853
        %s855 = sand.u32 %s27, 1
        %s856 = scalar_lea.sflag [#allocation8], %s855
        %s857 = sand.u32 %s268, 1
        %s858 = smul.addr %s857, 32
        %s859 = scalar_lea.vmem [#allocation9], %s858
        // Predicated region
        $region57: #{tpu_custom_call.1} parent=47 // pred_check
          %p860 = pneg %p222
        $region58: #{tpu_custom_call.1} parent=47 // pred_check_branch
          %862 = sbr.rel (%p860) target = $region60
        $region59: #{tpu_custom_call.1} parent=47 // pred_region
          %864 = vsyncadd %s846, 0
          %s865 = smul.addr %s32, 4
          %s866 = sadd.s32 %s33, %s865
          %s867 = smul.addr %s866, 8
          %s868 = scalar_lea.hbm %s7, %s867
          %s869 = sshll.u32 %s849, 4
          %s870 = int_to_ptr.vmem [resolvable:$true] %s869
          %s871 = sshll.u32 %s868, 4
          %s872 = int_to_ptr.hbm [resolvable:$true] %s871
          %877 = dma.vmem_to_hbm [thread:$0]  %s870, 512, %s872, %s846, 128, 128, 8
        $region60: #{tpu_custom_call.1} parent=47 // pred_fallthru
          _
        // Predicated region
        $region61: #{tpu_custom_call.1} parent=47 // pred_check
          %p878 = pneg %p250
        $region62: #{tpu_custom_call.1} parent=47 // pred_check_branch
          %880 = sbr.rel (%p878) target = $region64
        $region63: #{tpu_custom_call.1} parent=47 // pred_region
          %882 = vsyncadd %s851, 0
          %s883 = smul.addr %s32, 4
          %s884 = sadd.s32 %s33, %s883
          %s885 = smul.addr %s884, 8
          %s886 = scalar_lea.hbm %s8, %s885
          %s887 = sshll.u32 %s854, 4
          %s888 = int_to_ptr.vmem [resolvable:$true] %s887
          %s889 = sshll.u32 %s886, 4
          %s890 = int_to_ptr.hbm [resolvable:$true] %s889
          %895 = dma.vmem_to_hbm [thread:$0]  %s888, 512, %s890, %s851, 128, 128, 8
        $region64: #{tpu_custom_call.1} parent=47 // pred_fallthru
          _
        // Predicated region
        $region65: #{tpu_custom_call.1} parent=47 // pred_check
          %p896 = pneg %p278
        $region66: #{tpu_custom_call.1} parent=47 // pred_check_branch
          %898 = sbr.rel (%p896) target = $region68
        $region67: #{tpu_custom_call.1} parent=47 // pred_region
          %900 = vsyncadd %s856, 0
          %s901 = smul.addr %s32, 4
          %s902 = sadd.s32 %s33, %s901
          %s903 = smul.addr %s902, 8
          %s904 = scalar_lea.hbm %s9, %s903
          %s905 = sshll.u32 %s859, 4
          %s906 = int_to_ptr.vmem [resolvable:$true] %s905
          %s907 = sshll.u32 %s904, 4
          %s908 = int_to_ptr.hbm [resolvable:$true] %s907
          %913 = dma.vmem_to_hbm [thread:$0]  %s906, 512, %s908, %s856, 128, 128, 8
        $region68: #{tpu_custom_call.1} parent=47 // pred_fallthru
          _
      $region48: #{tpu_custom_call.1} parent=5 // pred_fallthru
        _
      %p914 = scmp.le.s32.totalorder 2, %s22
      // Predicated region
      $region69: #{tpu_custom_call.1} parent=5 // pred_check
        %p915 = pneg %p914
      $region70: #{tpu_custom_call.1} parent=5 // pred_check_branch
        %917 = sbr.rel (%p915) target = $region72
      $region71: #{tpu_custom_call.1} parent=5 // pred_region
        %s918 = ssub.s32 %s22, 2
        // Predicated region
        $region73: #{tpu_custom_call.1} parent=71 // pred_check
          %p919 = pneg %p228
        $region74: #{tpu_custom_call.1} parent=71 // pred_check_branch
          %921 = sbr.rel (%p919) target = $region76
        $region75: #{tpu_custom_call.1} parent=71 // pred_region
          %s922 = sand.u32 %s213, 1
          %s923 = scalar_lea.sflag [#allocation6], %s922
          %s924 = sand.u32 %s213, 1
          %s925 = smul.addr %s924, 32
          %s926 = scalar_lea.vmem [#allocation5], %s925
          %928 = dma.done %s923, 512
        $region76: #{tpu_custom_call.1} parent=71 // pred_fallthru
          _
        // Predicated region
        $region77: #{tpu_custom_call.1} parent=71 // pred_check
          %p929 = pneg %p256
        $region78: #{tpu_custom_call.1} parent=71 // pred_check_branch
          %931 = sbr.rel (%p929) target = $region80
        $region79: #{tpu_custom_call.1} parent=71 // pred_region
          %s932 = sand.u32 %s28, 1
          %s933 = scalar_lea.sflag [#allocation8], %s932
          %s934 = sand.u32 %s241, 1
          %s935 = smul.addr %s934, 32
          %s936 = scalar_lea.vmem [#allocation7], %s935
          %938 = dma.done %s933, 512
        $region80: #{tpu_custom_call.1} parent=71 // pred_fallthru
          _
        // Predicated region
        $region81: #{tpu_custom_call.1} parent=71 // pred_check
          %p939 = pneg %p284
        $region82: #{tpu_custom_call.1} parent=71 // pred_check_branch
          %941 = sbr.rel (%p939) target = $region84
        $region83: #{tpu_custom_call.1} parent=71 // pred_region
          %s942 = sand.u32 %s28, 1
          %s943 = scalar_lea.sflag [#allocation8], %s942
          %s944 = sand.u32 %s269, 1
          %s945 = smul.addr %s944, 32
          %s946 = scalar_lea.vmem [#allocation9], %s945
          %948 = dma.done %s943, 512
        $region84: #{tpu_custom_call.1} parent=71 // pred_fallthru
          _
      $region72: #{tpu_custom_call.1} parent=5 // pred_fallthru
        _
    $region6: #{tpu_custom_call.1} parent=1 // loop_footer
      %s26 = sadd.s32 1, %s22
    $region7: #{tpu_custom_call.1} parent=1 // loop_footer_branch
      %21 = sbr.rel target = $region3
    $region8: #{tpu_custom_call.1} parent=1 // loop_exit
      _
    %949 = vsyncpa [#allocation6], 1
    %s950 = scalar_lea.sflag [#allocation6], 1
    %951 = vsyncpa %s950, 1
    %952 = vsyncpa [#allocation8], 1
    %s953 = scalar_lea.sflag [#allocation8], 1
    %954 = vsyncpa %s953, 1

</llo_original>
